<compile_context>
chip_gen: v7x
topology: tpu7x:2x2x1
jax: 0.10.0
libtpu: 0.0.40
codegen_flags: <defaults>
</compile_context>

<pallas_src>
import jax
import jax.numpy as jnp
from jax import lax
from jax.experimental import pallas as pl
from jax.experimental.pallas import tpu as pltpu


# ----------------------------------------------------------------------------
# Fused kernel: (folded) projection + all GRU layers in one invocation
# ----------------------------------------------------------------------------
def _make_climate_gru_kernel(num_layers, T, B, H):
    """Builds the kernel. Ref layout:
       refs = [x, (w_in, b_in, w_hh_t, b_hn) * num_layers, out, h_buf(scratch)]

       x     : (T*B, Din)   time-major layer-0 input (projection already folded into w_in)
       w_in  : (Din, 3H)    input-gate weights, columns ordered [r | z | n]
       b_in  : (1, 3H)      b_ih with b_hh[r], b_hh[z] pre-folded in
       w_hh_t: (H, 3H)      hidden-gate weights, columns [r | z | n]
       b_hn  : (1, H)       b_hh[n] (must stay under r * (...))
       out   : (T*B, H)     time-major hidden sequence of the last layer
       h_buf : (T*B, H)     VMEM scratch holding the inter-layer hidden sequence
    """

    def kernel(*refs):
        x_ref = refs[0]
        out_ref = refs[1 + 4 * num_layers]
        h_buf = refs[2 + 4 * num_layers]

        layer_in = x_ref[...]                                      # (T*B, Din)
        for l in range(num_layers):
            w_in_ref, b_in_ref, w_hh_ref, b_hn_ref = refs[1 + 4 * l: 5 + 4 * l]

            # One MXU pass for the whole sequence's input-side gate pre-activations.
            gx = (
                jnp.dot(layer_in, w_in_ref[...], preferred_element_type=jnp.float32)
                + b_in_ref[...]
            )                                                      # (T*B, 3H)

            # Hoist recurrent weights / bias out of the unrolled time loop:
            # single VMEM->vreg load per layer, reused by every step's matmul.
            w_hh = w_hh_ref[...]                                   # (H, 3H)
            b_hn = b_hn_ref[...]                                   # (1, H)

            dst = out_ref if l == num_layers - 1 else h_buf
            h = jnp.zeros((B, H), jnp.float32)

            # Fully unrolled time recurrence (T is small and static): static slices,
            # no per-step grid/pipeline overhead, LLO schedules across steps.
            for t in range(T):
                gx_t = gx[t * B:(t + 1) * B]                       # (B, 3H)
                gh = jnp.dot(h, w_hh,
                             preferred_element_type=jnp.float32)   # (B, 3H), one N=3H matmul
                # r and z in a single lane-dense (B, 2H) add + sigmoid (one EUP push).
                rz = jax.nn.sigmoid(gx_t[:, :2 * H] + gh[:, :2 * H])
                r = rz[:, :H]
                z = rz[:, H:]
                n = jnp.tanh(gx_t[:, 2 * H:] + r * (gh[:, 2 * H:] + b_hn))
                h = n + z * (h - n)                                # == (1-z)*n + z*h
                dst[t * B:(t + 1) * B, :] = h

            if l < num_layers - 1:
                layer_in = h_buf[...]

    return kernel


def climate_gru_pallas(x_tm, prepped_layers, *, T, B):
    """x_tm: (T*B, Din) time-major -> (T*B, H) time-major hidden sequence (last layer)."""
    H = prepped_layers[0]["w_hh_t"].shape[0]
    num_layers = len(prepped_layers)
    kernel = _make_climate_gru_kernel(num_layers, T, B, H)

    args = [x_tm.astype(jnp.float32)]
    for lp in prepped_layers:
        args += [lp["w_in"], lp["b_in"], lp["w_hh_t"], lp["b_hn"]]

    return pl.pallas_call(
        kernel,
        out_shape=jax.ShapeDtypeStruct((T * B, H), jnp.float32),
        scratch_shapes=[pltpu.VMEM((T * B, H), jnp.float32)],
    )(*args)


# ----------------------------------------------------------------------------
# One-time parameter preparation (hoisted out of the forward pass)
# ----------------------------------------------------------------------------
def prepare_params(params):
    D = params["proj_w"].shape[0]
    H = D
    prepped = []
    for li, lp in enumerate(params["layers"]):
        w_ih_t = jnp.asarray(lp["w_ih"], jnp.float32).T            # (Din, 3H), cols [r|z|n]
        w_hh_t = jnp.asarray(lp["w_hh"], jnp.float32).T            # (H, 3H)
        b_ih = jnp.asarray(lp["b_ih"], jnp.float32)
        b_hh = jnp.asarray(lp["b_hh"], jnp.float32)

        # r/z hidden biases are purely additive -> fold into the input-side bias.
        b_in = b_ih + jnp.concatenate(
            [b_hh[0:H], b_hh[H:2 * H], jnp.zeros((H,), jnp.float32)])

        if li == 0:
            # Fold the Linear projection into layer 0's input weights/bias:
            #   (x @ P^T + p_b) @ W_ih^T + b_ih == x @ (P^T W_ih^T) + (p_b W_ih^T + b_ih)
            proj_w = jnp.asarray(params["proj_w"], jnp.float32)    # (D, Cin)
            proj_b = jnp.asarray(params["proj_b"], jnp.float32)    # (D,)
            w_in = proj_w.T @ w_ih_t                               # (Cin, 3H)
            b_in = proj_b @ w_ih_t + b_in
        else:
            w_in = w_ih_t

        prepped.append({
            "w_in": w_in,
            "b_in": b_in.reshape(1, 3 * H),
            "w_hh_t": w_hh_t,
            "b_hn": b_hh[2 * H:3 * H].reshape(1, H),
        })
    return prepped


# ----------------------------------------------------------------------------
# Forward (glue in plain JAX; all matmuls + recurrence in the single Pallas kernel)
# ----------------------------------------------------------------------------
@jax.jit
def climate_gru_forward(x, prepped_layers):
    """x: (B, T, Cin) -> output: (B, T, d_model)  (unidirectional, return_last_h=False)."""
    B, T, Cin = x.shape
    H = prepped_layers[0]["w_hh_t"].shape[0]
    # Single layout change at the boundary: batch-major -> time-major (tiny array).
    x_tm = jnp.transpose(x, (1, 0, 2)).reshape(T * B, Cin).astype(jnp.float32)
    h_tm = climate_gru_pallas(x_tm, prepped_layers, T=T, B=B)      # (T*B, H)
    # Single layout change back: time-major -> batch-major.
    return h_tm.reshape(T, B, H).transpose(1, 0, 2)


# ----------------------------------------------------------------------------
# Pure-JAX reference (PyTorch GRU semantics) for verification
# ----------------------------------------------------------------------------
def climate_gru_reference(x, params):
    B, T, Cin = x.shape
    D = params["proj_w"].shape[0]
    H = D
    h = x.reshape(B * T, Cin) @ params["proj_w"].T + params["proj_b"]
    h = h.reshape(B, T, D)

    for lp in params["layers"]:
        w_ih, w_hh, b_ih, b_hh = lp["w_ih"], lp["w_hh"], lp["b_ih"], lp["b_hh"]

        def step(h_prev, x_t):
            gi = x_t @ w_ih.T + b_ih
            gh = h_prev @ w_hh.T + b_hh
            r = jax.nn.sigmoid(gi[:, :H] + gh[:, :H])
            z = jax.nn.sigmoid(gi[:, H:2 * H] + gh[:, H:2 * H])
            n = jnp.tanh(gi[:, 2 * H:] + r * gh[:, 2 * H:])
            h_new = (1.0 - z) * n + z * h_prev
            return h_new, h_new

        _, outs = lax.scan(step, jnp.zeros((B, H), jnp.float32), jnp.swapaxes(h, 0, 1))
        h = jnp.swapaxes(outs, 0, 1)
    return h


# ----------------------------------------------------------------------------
# Deterministic parameter init (shapes per nn.Linear(11,64) and nn.GRU(64,64,2))
# ----------------------------------------------------------------------------
def init_params(key, climate_input_dim=11, d_model=64, num_layers=2):
    keys = jax.random.split(key, 2 + 4 * num_layers)
    k = 1.0 / jnp.sqrt(d_model)
    kp = 1.0 / jnp.sqrt(climate_input_dim)

    params = {
        "proj_w": jax.random.uniform(keys[0], (d_model, climate_input_dim),
                                     jnp.float32, -kp, kp),
        "proj_b": jax.random.uniform(keys[1], (d_model,), jnp.float32, -kp, kp),
        "layers": [],
    }
    for l in range(num_layers):
        in_dim = d_model  # after projection every layer input is d_model
        kk = keys[2 + 4 * l: 2 + 4 * (l + 1)]
        params["layers"].append({
            "w_ih": jax.random.uniform(kk[0], (3 * d_model, in_dim), jnp.float32, -k, k),
            "w_hh": jax.random.uniform(kk[1], (3 * d_model, d_model), jnp.float32, -k, k),
            "b_ih": jax.random.uniform(kk[2], (3 * d_model,), jnp.float32, -k, k),
            "b_hh": jax.random.uniform(kk[3], (3 * d_model,), jnp.float32, -k, k),
        })
    return params


if __name__ == "__main__":
    B, T, CIN, D, NLAYERS = 2, 8, 11, 64, 2

    root = jax.random.PRNGKey(0)
    k_params, k_x = jax.random.split(root)
    params = init_params(k_params, climate_input_dim=CIN, d_model=D, num_layers=NLAYERS)
    x = jax.random.normal(k_x, (B, T, CIN), dtype=jnp.float32)

    prepped = prepare_params(params)

    out = jax.block_until_ready(climate_gru_forward(x, prepped))
    assert out.shape == (B, T, D), out.shape

    ref = jax.block_until_ready(climate_gru_reference(x, params))
    if not jnp.allclose(out, ref, atol=2e-4, rtol=2e-4):
        max_err = float(jnp.max(jnp.abs(out - ref)))
        raise AssertionError(
            f"Pallas ClimateGRU output mismatch vs. reference (max abs err {max_err})")

    print("KERNEL_OK")
</pallas_src>

<mosaic_0001>
module attributes {stable_mosaic.version = 11 : i64} {
  func.func @kernel(%arg0: memref<16x11xf32, #tpu.memory_space<vmem>>, %arg1: memref<11x192xf32, #tpu.memory_space<vmem>>, %arg2: memref<1x192xf32, #tpu.memory_space<vmem>>, %arg3: memref<64x192xf32, #tpu.memory_space<vmem>>, %arg4: memref<1x64xf32, #tpu.memory_space<vmem>>, %arg5: memref<64x192xf32, #tpu.memory_space<vmem>>, %arg6: memref<1x192xf32, #tpu.memory_space<vmem>>, %arg7: memref<64x192xf32, #tpu.memory_space<vmem>>, %arg8: memref<1x64xf32, #tpu.memory_space<vmem>>, %arg9: memref<16x64xf32, #tpu.memory_space<vmem>>, %arg10: memref<16x64xf32, #tpu.memory_space<vmem>>) attributes {dimension_semantics = [], scalar_prefetch = 0 : i64, scratch_operands = 1 : i64, tpu.core_type = #tpu.core_type<tc>} {
    %c0 = arith.constant 0 : index
    %c0_0 = arith.constant 0 : index
    %0 = vector.load %arg0[%c0, %c0_0] : memref<16x11xf32, #tpu.memory_space<vmem>>, vector<16x11xf32>
    %c0_1 = arith.constant 0 : index
    %c0_2 = arith.constant 0 : index
    %1 = vector.load %arg1[%c0_1, %c0_2] : memref<11x192xf32, #tpu.memory_space<vmem>>, vector<11x192xf32>
    %cst = arith.constant dense<0.000000e+00> : vector<16x192xf32>
    %2 = tpu.matmul %0, %1, %cst {dimension_numbers = #tpu.dot_dimension_numbers<[1], [0], [0], [1], [0, 0, 1, 1], [], []>} : vector<16x11xf32>, vector<11x192xf32>, vector<16x192xf32> -> vector<16x192xf32>
    %c0_3 = arith.constant 0 : index
    %c0_4 = arith.constant 0 : index
    %3 = vector.load %arg2[%c0_3, %c0_4] : memref<1x192xf32, #tpu.memory_space<vmem>>, vector<1x192xf32>
    %4 = vector.broadcast %3 : vector<1x192xf32> to vector<16x192xf32>
    %5 = arith.addf %2, %4 : vector<16x192xf32>
    %c0_5 = arith.constant 0 : index
    %c0_6 = arith.constant 0 : index
    %6 = vector.load %arg3[%c0_5, %c0_6] : memref<64x192xf32, #tpu.memory_space<vmem>>, vector<64x192xf32>
    %c0_7 = arith.constant 0 : index
    %c0_8 = arith.constant 0 : index
    %7 = vector.load %arg4[%c0_7, %c0_8] : memref<1x64xf32, #tpu.memory_space<vmem>>, vector<1x64xf32>
    %cst_9 = arith.constant 0.000000e+00 : f32
    %8 = vector.broadcast %cst_9 : f32 to vector<2x64xf32>
    %9 = vector.extract_strided_slice %5 {offsets = [0, 0], sizes = [2, 192], strides = [1, 1]} : vector<16x192xf32> to vector<2x192xf32>
    %cst_10 = arith.constant dense<0.000000e+00> : vector<2x192xf32>
    %10 = tpu.matmul %8, %6, %cst_10 {dimension_numbers = #tpu.dot_dimension_numbers<[1], [0], [0], [1], [0, 0, 1, 1], [], []>} : vector<2x64xf32>, vector<64x192xf32>, vector<2x192xf32> -> vector<2x192xf32>
    %11 = vector.extract_strided_slice %9 {offsets = [0, 0], sizes = [2, 128], strides = [1, 1]} : vector<2x192xf32> to vector<2x128xf32>
    %12 = vector.extract_strided_slice %10 {offsets = [0, 0], sizes = [2, 128], strides = [1, 1]} : vector<2x192xf32> to vector<2x128xf32>
    %13 = arith.addf %11, %12 : vector<2x128xf32>
    %14 = arith.negf %13 : vector<2x128xf32>
    %15 = math.exp %14 : vector<2x128xf32>
    %cst_11 = arith.constant 1.000000e+00 : f32
    %16 = vector.broadcast %cst_11 : f32 to vector<2x128xf32>
    %17 = arith.addf %16, %15 : vector<2x128xf32>
    %18 = arith.divf %16, %17 : vector<2x128xf32>
    %19 = vector.extract_strided_slice %18 {offsets = [0, 0], sizes = [2, 64], strides = [1, 1]} : vector<2x128xf32> to vector<2x64xf32>
    %20 = vector.extract_strided_slice %18 {offsets = [0, 64], sizes = [2, 64], strides = [1, 1]} : vector<2x128xf32> to vector<2x64xf32>
    %21 = vector.extract_strided_slice %9 {offsets = [0, 128], sizes = [2, 64], strides = [1, 1]} : vector<2x192xf32> to vector<2x64xf32>
    %22 = vector.extract_strided_slice %10 {offsets = [0, 128], sizes = [2, 64], strides = [1, 1]} : vector<2x192xf32> to vector<2x64xf32>
    %23 = vector.broadcast %7 : vector<1x64xf32> to vector<2x64xf32>
    %24 = arith.addf %22, %23 : vector<2x64xf32>
    %25 = arith.mulf %19, %24 : vector<2x64xf32>
    %26 = arith.addf %21, %25 : vector<2x64xf32>
    %27 = math.tanh %26 : vector<2x64xf32>
    %28 = arith.subf %8, %27 : vector<2x64xf32>
    %29 = arith.mulf %20, %28 : vector<2x64xf32>
    %30 = arith.addf %27, %29 : vector<2x64xf32>
    %c0_12 = arith.constant 0 : index
    %c0_13 = arith.constant 0 : index
    %31 = vector.load %arg10[%c0_12, %c0_13] : memref<16x64xf32, #tpu.memory_space<vmem>>, vector<2x64xf32>
    tpu.vector_store %arg10[%c0_12, %c0_13], %30 {strides = array<i32>} : memref<16x64xf32, #tpu.memory_space<vmem>>, vector<2x64xf32>,
    %32 = vector.extract_strided_slice %5 {offsets = [2, 0], sizes = [2, 192], strides = [1, 1]} : vector<16x192xf32> to vector<2x192xf32>
    %cst_14 = arith.constant dense<0.000000e+00> : vector<2x192xf32>
    %33 = tpu.matmul %30, %6, %cst_14 {dimension_numbers = #tpu.dot_dimension_numbers<[1], [0], [0], [1], [0, 0, 1, 1], [], []>} : vector<2x64xf32>, vector<64x192xf32>, vector<2x192xf32> -> vector<2x192xf32>
    %34 = vector.extract_strided_slice %32 {offsets = [0, 0], sizes = [2, 128], strides = [1, 1]} : vector<2x192xf32> to vector<2x128xf32>
    %35 = vector.extract_strided_slice %33 {offsets = [0, 0], sizes = [2, 128], strides = [1, 1]} : vector<2x192xf32> to vector<2x128xf32>
    %36 = arith.addf %34, %35 : vector<2x128xf32>
    %37 = arith.negf %36 : vector<2x128xf32>
    %38 = math.exp %37 : vector<2x128xf32>
    %cst_15 = arith.constant 1.000000e+00 : f32
    %39 = vector.broadcast %cst_15 : f32 to vector<2x128xf32>
    %40 = arith.addf %39, %38 : vector<2x128xf32>
    %41 = arith.divf %39, %40 : vector<2x128xf32>
    %42 = vector.extract_strided_slice %41 {offsets = [0, 0], sizes = [2, 64], strides = [1, 1]} : vector<2x128xf32> to vector<2x64xf32>
    %43 = vector.extract_strided_slice %41 {offsets = [0, 64], sizes = [2, 64], strides = [1, 1]} : vector<2x128xf32> to vector<2x64xf32>
    %44 = vector.extract_strided_slice %32 {offsets = [0, 128], sizes = [2, 64], strides = [1, 1]} : vector<2x192xf32> to vector<2x64xf32>
    %45 = vector.extract_strided_slice %33 {offsets = [0, 128], sizes = [2, 64], strides = [1, 1]} : vector<2x192xf32> to vector<2x64xf32>
    %46 = vector.broadcast %7 : vector<1x64xf32> to vector<2x64xf32>
    %47 = arith.addf %45, %46 : vector<2x64xf32>
    %48 = arith.mulf %42, %47 : vector<2x64xf32>
    %49 = arith.addf %44, %48 : vector<2x64xf32>
    %50 = math.tanh %49 : vector<2x64xf32>
    %51 = arith.subf %30, %50 : vector<2x64xf32>
    %52 = arith.mulf %43, %51 : vector<2x64xf32>
    %53 = arith.addf %50, %52 : vector<2x64xf32>
    %c2 = arith.constant 2 : index
    %c0_16 = arith.constant 0 : index
    %54 = vector.load %arg10[%c2, %c0_16] : memref<16x64xf32, #tpu.memory_space<vmem>>, vector<2x64xf32>
    tpu.vector_store %arg10[%c2, %c0_16], %53 {strides = array<i32>} : memref<16x64xf32, #tpu.memory_space<vmem>>, vector<2x64xf32>,
    %55 = vector.extract_strided_slice %5 {offsets = [4, 0], sizes = [2, 192], strides = [1, 1]} : vector<16x192xf32> to vector<2x192xf32>
    %cst_17 = arith.constant dense<0.000000e+00> : vector<2x192xf32>
    %56 = tpu.matmul %53, %6, %cst_17 {dimension_numbers = #tpu.dot_dimension_numbers<[1], [0], [0], [1], [0, 0, 1, 1], [], []>} : vector<2x64xf32>, vector<64x192xf32>, vector<2x192xf32> -> vector<2x192xf32>
    %57 = vector.extract_strided_slice %55 {offsets = [0, 0], sizes = [2, 128], strides = [1, 1]} : vector<2x192xf32> to vector<2x128xf32>
    %58 = vector.extract_strided_slice %56 {offsets = [0, 0], sizes = [2, 128], strides = [1, 1]} : vector<2x192xf32> to vector<2x128xf32>
    %59 = arith.addf %57, %58 : vector<2x128xf32>
    %60 = arith.negf %59 : vector<2x128xf32>
    %61 = math.exp %60 : vector<2x128xf32>
    %cst_18 = arith.constant 1.000000e+00 : f32
    %62 = vector.broadcast %cst_18 : f32 to vector<2x128xf32>
    %63 = arith.addf %62, %61 : vector<2x128xf32>
    %64 = arith.divf %62, %63 : vector<2x128xf32>
    %65 = vector.extract_strided_slice %64 {offsets = [0, 0], sizes = [2, 64], strides = [1, 1]} : vector<2x128xf32> to vector<2x64xf32>
    %66 = vector.extract_strided_slice %64 {offsets = [0, 64], sizes = [2, 64], strides = [1, 1]} : vector<2x128xf32> to vector<2x64xf32>
    %67 = vector.extract_strided_slice %55 {offsets = [0, 128], sizes = [2, 64], strides = [1, 1]} : vector<2x192xf32> to vector<2x64xf32>
    %68 = vector.extract_strided_slice %56 {offsets = [0, 128], sizes = [2, 64], strides = [1, 1]} : vector<2x192xf32> to vector<2x64xf32>
    %69 = vector.broadcast %7 : vector<1x64xf32> to vector<2x64xf32>
    %70 = arith.addf %68, %69 : vector<2x64xf32>
    %71 = arith.mulf %65, %70 : vector<2x64xf32>
    %72 = arith.addf %67, %71 : vector<2x64xf32>
    %73 = math.tanh %72 : vector<2x64xf32>
    %74 = arith.subf %53, %73 : vector<2x64xf32>
    %75 = arith.mulf %66, %74 : vector<2x64xf32>
    %76 = arith.addf %73, %75 : vector<2x64xf32>
    %c4 = arith.constant 4 : index
    %c0_19 = arith.constant 0 : index
    %77 = vector.load %arg10[%c4, %c0_19] : memref<16x64xf32, #tpu.memory_space<vmem>>, vector<2x64xf32>
    tpu.vector_store %arg10[%c4, %c0_19], %76 {strides = array<i32>} : memref<16x64xf32, #tpu.memory_space<vmem>>, vector<2x64xf32>,
    %78 = vector.extract_strided_slice %5 {offsets = [6, 0], sizes = [2, 192], strides = [1, 1]} : vector<16x192xf32> to vector<2x192xf32>
    %cst_20 = arith.constant dense<0.000000e+00> : vector<2x192xf32>
    %79 = tpu.matmul %76, %6, %cst_20 {dimension_numbers = #tpu.dot_dimension_numbers<[1], [0], [0], [1], [0, 0, 1, 1], [], []>} : vector<2x64xf32>, vector<64x192xf32>, vector<2x192xf32> -> vector<2x192xf32>
    %80 = vector.extract_strided_slice %78 {offsets = [0, 0], sizes = [2, 128], strides = [1, 1]} : vector<2x192xf32> to vector<2x128xf32>
    %81 = vector.extract_strided_slice %79 {offsets = [0, 0], sizes = [2, 128], strides = [1, 1]} : vector<2x192xf32> to vector<2x128xf32>
    %82 = arith.addf %80, %81 : vector<2x128xf32>
    %83 = arith.negf %82 : vector<2x128xf32>
    %84 = math.exp %83 : vector<2x128xf32>
    %cst_21 = arith.constant 1.000000e+00 : f32
    %85 = vector.broadcast %cst_21 : f32 to vector<2x128xf32>
    %86 = arith.addf %85, %84 : vector<2x128xf32>
    %87 = arith.divf %85, %86 : vector<2x128xf32>
    %88 = vector.extract_strided_slice %87 {offsets = [0, 0], sizes = [2, 64], strides = [1, 1]} : vector<2x128xf32> to vector<2x64xf32>
    %89 = vector.extract_strided_slice %87 {offsets = [0, 64], sizes = [2, 64], strides = [1, 1]} : vector<2x128xf32> to vector<2x64xf32>
    %90 = vector.extract_strided_slice %78 {offsets = [0, 128], sizes = [2, 64], strides = [1, 1]} : vector<2x192xf32> to vector<2x64xf32>
    %91 = vector.extract_strided_slice %79 {offsets = [0, 128], sizes = [2, 64], strides = [1, 1]} : vector<2x192xf32> to vector<2x64xf32>
    %92 = vector.broadcast %7 : vector<1x64xf32> to vector<2x64xf32>
    %93 = arith.addf %91, %92 : vector<2x64xf32>
    %94 = arith.mulf %88, %93 : vector<2x64xf32>
    %95 = arith.addf %90, %94 : vector<2x64xf32>
    %96 = math.tanh %95 : vector<2x64xf32>
    %97 = arith.subf %76, %96 : vector<2x64xf32>
    %98 = arith.mulf %89, %97 : vector<2x64xf32>
    %99 = arith.addf %96, %98 : vector<2x64xf32>
    %c6 = arith.constant 6 : index
    %c0_22 = arith.constant 0 : index
    %100 = vector.load %arg10[%c6, %c0_22] : memref<16x64xf32, #tpu.memory_space<vmem>>, vector<2x64xf32>
    tpu.vector_store %arg10[%c6, %c0_22], %99 {strides = array<i32>} : memref<16x64xf32, #tpu.memory_space<vmem>>, vector<2x64xf32>,
    %101 = vector.extract_strided_slice %5 {offsets = [8, 0], sizes = [2, 192], strides = [1, 1]} : vector<16x192xf32> to vector<2x192xf32>
    %cst_23 = arith.constant dense<0.000000e+00> : vector<2x192xf32>
    %102 = tpu.matmul %99, %6, %cst_23 {dimension_numbers = #tpu.dot_dimension_numbers<[1], [0], [0], [1], [0, 0, 1, 1], [], []>} : vector<2x64xf32>, vector<64x192xf32>, vector<2x192xf32> -> vector<2x192xf32>
    %103 = vector.extract_strided_slice %101 {offsets = [0, 0], sizes = [2, 128], strides = [1, 1]} : vector<2x192xf32> to vector<2x128xf32>
    %104 = vector.extract_strided_slice %102 {offsets = [0, 0], sizes = [2, 128], strides = [1, 1]} : vector<2x192xf32> to vector<2x128xf32>
    %105 = arith.addf %103, %104 : vector<2x128xf32>
    %106 = arith.negf %105 : vector<2x128xf32>
    %107 = math.exp %106 : vector<2x128xf32>
    %cst_24 = arith.constant 1.000000e+00 : f32
    %108 = vector.broadcast %cst_24 : f32 to vector<2x128xf32>
    %109 = arith.addf %108, %107 : vector<2x128xf32>
    %110 = arith.divf %108, %109 : vector<2x128xf32>
    %111 = vector.extract_strided_slice %110 {offsets = [0, 0], sizes = [2, 64], strides = [1, 1]} : vector<2x128xf32> to vector<2x64xf32>
    %112 = vector.extract_strided_slice %110 {offsets = [0, 64], sizes = [2, 64], strides = [1, 1]} : vector<2x128xf32> to vector<2x64xf32>
    %113 = vector.extract_strided_slice %101 {offsets = [0, 128], sizes = [2, 64], strides = [1, 1]} : vector<2x192xf32> to vector<2x64xf32>
    %114 = vector.extract_strided_slice %102 {offsets = [0, 128], sizes = [2, 64], strides = [1, 1]} : vector<2x192xf32> to vector<2x64xf32>
    %115 = vector.broadcast %7 : vector<1x64xf32> to vector<2x64xf32>
    %116 = arith.addf %114, %115 : vector<2x64xf32>
    %117 = arith.mulf %111, %116 : vector<2x64xf32>
    %118 = arith.addf %113, %117 : vector<2x64xf32>
    %119 = math.tanh %118 : vector<2x64xf32>
    %120 = arith.subf %99, %119 : vector<2x64xf32>
    %121 = arith.mulf %112, %120 : vector<2x64xf32>
    %122 = arith.addf %119, %121 : vector<2x64xf32>
    %c8 = arith.constant 8 : index
    %c0_25 = arith.constant 0 : index
    %123 = vector.load %arg10[%c8, %c0_25] : memref<16x64xf32, #tpu.memory_space<vmem>>, vector<2x64xf32>
    tpu.vector_store %arg10[%c8, %c0_25], %122 {strides = array<i32>} : memref<16x64xf32, #tpu.memory_space<vmem>>, vector<2x64xf32>,
    %124 = vector.extract_strided_slice %5 {offsets = [10, 0], sizes = [2, 192], strides = [1, 1]} : vector<16x192xf32> to vector<2x192xf32>
    %cst_26 = arith.constant dense<0.000000e+00> : vector<2x192xf32>
    %125 = tpu.matmul %122, %6, %cst_26 {dimension_numbers = #tpu.dot_dimension_numbers<[1], [0], [0], [1], [0, 0, 1, 1], [], []>} : vector<2x64xf32>, vector<64x192xf32>, vector<2x192xf32> -> vector<2x192xf32>
    %126 = vector.extract_strided_slice %124 {offsets = [0, 0], sizes = [2, 128], strides = [1, 1]} : vector<2x192xf32> to vector<2x128xf32>
    %127 = vector.extract_strided_slice %125 {offsets = [0, 0], sizes = [2, 128], strides = [1, 1]} : vector<2x192xf32> to vector<2x128xf32>
    %128 = arith.addf %126, %127 : vector<2x128xf32>
    %129 = arith.negf %128 : vector<2x128xf32>
    %130 = math.exp %129 : vector<2x128xf32>
    %cst_27 = arith.constant 1.000000e+00 : f32
    %131 = vector.broadcast %cst_27 : f32 to vector<2x128xf32>
    %132 = arith.addf %131, %130 : vector<2x128xf32>
    %133 = arith.divf %131, %132 : vector<2x128xf32>
    %134 = vector.extract_strided_slice %133 {offsets = [0, 0], sizes = [2, 64], strides = [1, 1]} : vector<2x128xf32> to vector<2x64xf32>
    %135 = vector.extract_strided_slice %133 {offsets = [0, 64], sizes = [2, 64], strides = [1, 1]} : vector<2x128xf32> to vector<2x64xf32>
    %136 = vector.extract_strided_slice %124 {offsets = [0, 128], sizes = [2, 64], strides = [1, 1]} : vector<2x192xf32> to vector<2x64xf32>
    %137 = vector.extract_strided_slice %125 {offsets = [0, 128], sizes = [2, 64], strides = [1, 1]} : vector<2x192xf32> to vector<2x64xf32>
    %138 = vector.broadcast %7 : vector<1x64xf32> to vector<2x64xf32>
    %139 = arith.addf %137, %138 : vector<2x64xf32>
    %140 = arith.mulf %134, %139 : vector<2x64xf32>
    %141 = arith.addf %136, %140 : vector<2x64xf32>
    %142 = math.tanh %141 : vector<2x64xf32>
    %143 = arith.subf %122, %142 : vector<2x64xf32>
    %144 = arith.mulf %135, %143 : vector<2x64xf32>
    %145 = arith.addf %142, %144 : vector<2x64xf32>
    %c10 = arith.constant 10 : index
    %c0_28 = arith.constant 0 : index
    %146 = vector.load %arg10[%c10, %c0_28] : memref<16x64xf32, #tpu.memory_space<vmem>>, vector<2x64xf32>
    tpu.vector_store %arg10[%c10, %c0_28], %145 {strides = array<i32>} : memref<16x64xf32, #tpu.memory_space<vmem>>, vector<2x64xf32>,
    %147 = vector.extract_strided_slice %5 {offsets = [12, 0], sizes = [2, 192], strides = [1, 1]} : vector<16x192xf32> to vector<2x192xf32>
    %cst_29 = arith.constant dense<0.000000e+00> : vector<2x192xf32>
    %148 = tpu.matmul %145, %6, %cst_29 {dimension_numbers = #tpu.dot_dimension_numbers<[1], [0], [0], [1], [0, 0, 1, 1], [], []>} : vector<2x64xf32>, vector<64x192xf32>, vector<2x192xf32> -> vector<2x192xf32>
    %149 = vector.extract_strided_slice %147 {offsets = [0, 0], sizes = [2, 128], strides = [1, 1]} : vector<2x192xf32> to vector<2x128xf32>
    %150 = vector.extract_strided_slice %148 {offsets = [0, 0], sizes = [2, 128], strides = [1, 1]} : vector<2x192xf32> to vector<2x128xf32>
    %151 = arith.addf %149, %150 : vector<2x128xf32>
    %152 = arith.negf %151 : vector<2x128xf32>
    %153 = math.exp %152 : vector<2x128xf32>
    %cst_30 = arith.constant 1.000000e+00 : f32
    %154 = vector.broadcast %cst_30 : f32 to vector<2x128xf32>
    %155 = arith.addf %154, %153 : vector<2x128xf32>
    %156 = arith.divf %154, %155 : vector<2x128xf32>
    %157 = vector.extract_strided_slice %156 {offsets = [0, 0], sizes = [2, 64], strides = [1, 1]} : vector<2x128xf32> to vector<2x64xf32>
    %158 = vector.extract_strided_slice %156 {offsets = [0, 64], sizes = [2, 64], strides = [1, 1]} : vector<2x128xf32> to vector<2x64xf32>
    %159 = vector.extract_strided_slice %147 {offsets = [0, 128], sizes = [2, 64], strides = [1, 1]} : vector<2x192xf32> to vector<2x64xf32>
    %160 = vector.extract_strided_slice %148 {offsets = [0, 128], sizes = [2, 64], strides = [1, 1]} : vector<2x192xf32> to vector<2x64xf32>
    %161 = vector.broadcast %7 : vector<1x64xf32> to vector<2x64xf32>
    %162 = arith.addf %160, %161 : vector<2x64xf32>
    %163 = arith.mulf %157, %162 : vector<2x64xf32>
    %164 = arith.addf %159, %163 : vector<2x64xf32>
    %165 = math.tanh %164 : vector<2x64xf32>
    %166 = arith.subf %145, %165 : vector<2x64xf32>
    %167 = arith.mulf %158, %166 : vector<2x64xf32>
    %168 = arith.addf %165, %167 : vector<2x64xf32>
    %c12 = arith.constant 12 : index
    %c0_31 = arith.constant 0 : index
    %169 = vector.load %arg10[%c12, %c0_31] : memref<16x64xf32, #tpu.memory_space<vmem>>, vector<2x64xf32>
    tpu.vector_store %arg10[%c12, %c0_31], %168 {strides = array<i32>} : memref<16x64xf32, #tpu.memory_space<vmem>>, vector<2x64xf32>,
    %170 = vector.extract_strided_slice %5 {offsets = [14, 0], sizes = [2, 192], strides = [1, 1]} : vector<16x192xf32> to vector<2x192xf32>
    %cst_32 = arith.constant dense<0.000000e+00> : vector<2x192xf32>
    %171 = tpu.matmul %168, %6, %cst_32 {dimension_numbers = #tpu.dot_dimension_numbers<[1], [0], [0], [1], [0, 0, 1, 1], [], []>} : vector<2x64xf32>, vector<64x192xf32>, vector<2x192xf32> -> vector<2x192xf32>
    %172 = vector.extract_strided_slice %170 {offsets = [0, 0], sizes = [2, 128], strides = [1, 1]} : vector<2x192xf32> to vector<2x128xf32>
    %173 = vector.extract_strided_slice %171 {offsets = [0, 0], sizes = [2, 128], strides = [1, 1]} : vector<2x192xf32> to vector<2x128xf32>
    %174 = arith.addf %172, %173 : vector<2x128xf32>
    %175 = arith.negf %174 : vector<2x128xf32>
    %176 = math.exp %175 : vector<2x128xf32>
    %cst_33 = arith.constant 1.000000e+00 : f32
    %177 = vector.broadcast %cst_33 : f32 to vector<2x128xf32>
    %178 = arith.addf %177, %176 : vector<2x128xf32>
    %179 = arith.divf %177, %178 : vector<2x128xf32>
    %180 = vector.extract_strided_slice %179 {offsets = [0, 0], sizes = [2, 64], strides = [1, 1]} : vector<2x128xf32> to vector<2x64xf32>
    %181 = vector.extract_strided_slice %179 {offsets = [0, 64], sizes = [2, 64], strides = [1, 1]} : vector<2x128xf32> to vector<2x64xf32>
    %182 = vector.extract_strided_slice %170 {offsets = [0, 128], sizes = [2, 64], strides = [1, 1]} : vector<2x192xf32> to vector<2x64xf32>
    %183 = vector.extract_strided_slice %171 {offsets = [0, 128], sizes = [2, 64], strides = [1, 1]} : vector<2x192xf32> to vector<2x64xf32>
    %184 = vector.broadcast %7 : vector<1x64xf32> to vector<2x64xf32>
    %185 = arith.addf %183, %184 : vector<2x64xf32>
    %186 = arith.mulf %180, %185 : vector<2x64xf32>
    %187 = arith.addf %182, %186 : vector<2x64xf32>
    %188 = math.tanh %187 : vector<2x64xf32>
    %189 = arith.subf %168, %188 : vector<2x64xf32>
    %190 = arith.mulf %181, %189 : vector<2x64xf32>
    %191 = arith.addf %188, %190 : vector<2x64xf32>
    %c14 = arith.constant 14 : index
    %c0_34 = arith.constant 0 : index
    %192 = vector.load %arg10[%c14, %c0_34] : memref<16x64xf32, #tpu.memory_space<vmem>>, vector<2x64xf32>
    tpu.vector_store %arg10[%c14, %c0_34], %191 {strides = array<i32>} : memref<16x64xf32, #tpu.memory_space<vmem>>, vector<2x64xf32>,
    %c0_35 = arith.constant 0 : index
    %c0_36 = arith.constant 0 : index
    %193 = vector.load %arg10[%c0_35, %c0_36] : memref<16x64xf32, #tpu.memory_space<vmem>>, vector<16x64xf32>
    %c0_37 = arith.constant 0 : index
    %c0_38 = arith.constant 0 : index
    %194 = vector.load %arg5[%c0_37, %c0_38] : memref<64x192xf32, #tpu.memory_space<vmem>>, vector<64x192xf32>
    %cst_39 = arith.constant dense<0.000000e+00> : vector<16x192xf32>
    %195 = tpu.matmul %193, %194, %cst_39 {dimension_numbers = #tpu.dot_dimension_numbers<[1], [0], [0], [1], [0, 0, 1, 1], [], []>} : vector<16x64xf32>, vector<64x192xf32>, vector<16x192xf32> -> vector<16x192xf32>
    %c0_40 = arith.constant 0 : index
    %c0_41 = arith.constant 0 : index
    %196 = vector.load %arg6[%c0_40, %c0_41] : memref<1x192xf32, #tpu.memory_space<vmem>>, vector<1x192xf32>
    %197 = vector.broadcast %196 : vector<1x192xf32> to vector<16x192xf32>
    %198 = arith.addf %195, %197 : vector<16x192xf32>
    %c0_42 = arith.constant 0 : index
    %c0_43 = arith.constant 0 : index
    %199 = vector.load %arg7[%c0_42, %c0_43] : memref<64x192xf32, #tpu.memory_space<vmem>>, vector<64x192xf32>
    %c0_44 = arith.constant 0 : index
    %c0_45 = arith.constant 0 : index
    %200 = vector.load %arg8[%c0_44, %c0_45] : memref<1x64xf32, #tpu.memory_space<vmem>>, vector<1x64xf32>
    %cst_46 = arith.constant 0.000000e+00 : f32
    %201 = vector.broadcast %cst_46 : f32 to vector<2x64xf32>
    %202 = vector.extract_strided_slice %198 {offsets = [0, 0], sizes = [2, 192], strides = [1, 1]} : vector<16x192xf32> to vector<2x192xf32>
    %cst_47 = arith.constant dense<0.000000e+00> : vector<2x192xf32>
    %203 = tpu.matmul %201, %199, %cst_47 {dimension_numbers = #tpu.dot_dimension_numbers<[1], [0], [0], [1], [0, 0, 1, 1], [], []>} : vector<2x64xf32>, vector<64x192xf32>, vector<2x192xf32> -> vector<2x192xf32>
    %204 = vector.extract_strided_slice %202 {offsets = [0, 0], sizes = [2, 128], strides = [1, 1]} : vector<2x192xf32> to vector<2x128xf32>
    %205 = vector.extract_strided_slice %203 {offsets = [0, 0], sizes = [2, 128], strides = [1, 1]} : vector<2x192xf32> to vector<2x128xf32>
    %206 = arith.addf %204, %205 : vector<2x128xf32>
    %207 = arith.negf %206 : vector<2x128xf32>
    %208 = math.exp %207 : vector<2x128xf32>
    %cst_48 = arith.constant 1.000000e+00 : f32
    %209 = vector.broadcast %cst_48 : f32 to vector<2x128xf32>
    %210 = arith.addf %209, %208 : vector<2x128xf32>
    %211 = arith.divf %209, %210 : vector<2x128xf32>
    %212 = vector.extract_strided_slice %211 {offsets = [0, 0], sizes = [2, 64], strides = [1, 1]} : vector<2x128xf32> to vector<2x64xf32>
    %213 = vector.extract_strided_slice %211 {offsets = [0, 64], sizes = [2, 64], strides = [1, 1]} : vector<2x128xf32> to vector<2x64xf32>
    %214 = vector.extract_strided_slice %202 {offsets = [0, 128], sizes = [2, 64], strides = [1, 1]} : vector<2x192xf32> to vector<2x64xf32>
    %215 = vector.extract_strided_slice %203 {offsets = [0, 128], sizes = [2, 64], strides = [1, 1]} : vector<2x192xf32> to vector<2x64xf32>
    %216 = vector.broadcast %200 : vector<1x64xf32> to vector<2x64xf32>
    %217 = arith.addf %215, %216 : vector<2x64xf32>
    %218 = arith.mulf %212, %217 : vector<2x64xf32>
    %219 = arith.addf %214, %218 : vector<2x64xf32>
    %220 = math.tanh %219 : vector<2x64xf32>
    %221 = arith.subf %201, %220 : vector<2x64xf32>
    %222 = arith.mulf %213, %221 : vector<2x64xf32>
    %223 = arith.addf %220, %222 : vector<2x64xf32>
    %c0_49 = arith.constant 0 : index
    %c0_50 = arith.constant 0 : index
    %224 = vector.load %arg9[%c0_49, %c0_50] : memref<16x64xf32, #tpu.memory_space<vmem>>, vector<2x64xf32>
    tpu.vector_store %arg9[%c0_49, %c0_50], %223 {strides = array<i32>} : memref<16x64xf32, #tpu.memory_space<vmem>>, vector<2x64xf32>,
    %225 = vector.extract_strided_slice %198 {offsets = [2, 0], sizes = [2, 192], strides = [1, 1]} : vector<16x192xf32> to vector<2x192xf32>
    %cst_51 = arith.constant dense<0.000000e+00> : vector<2x192xf32>
    %226 = tpu.matmul %223, %199, %cst_51 {dimension_numbers = #tpu.dot_dimension_numbers<[1], [0], [0], [1], [0, 0, 1, 1], [], []>} : vector<2x64xf32>, vector<64x192xf32>, vector<2x192xf32> -> vector<2x192xf32>
    %227 = vector.extract_strided_slice %225 {offsets = [0, 0], sizes = [2, 128], strides = [1, 1]} : vector<2x192xf32> to vector<2x128xf32>
    %228 = vector.extract_strided_slice %226 {offsets = [0, 0], sizes = [2, 128], strides = [1, 1]} : vector<2x192xf32> to vector<2x128xf32>
    %229 = arith.addf %227, %228 : vector<2x128xf32>
    %230 = arith.negf %229 : vector<2x128xf32>
    %231 = math.exp %230 : vector<2x128xf32>
    %cst_52 = arith.constant 1.000000e+00 : f32
    %232 = vector.broadcast %cst_52 : f32 to vector<2x128xf32>
    %233 = arith.addf %232, %231 : vector<2x128xf32>
    %234 = arith.divf %232, %233 : vector<2x128xf32>
    %235 = vector.extract_strided_slice %234 {offsets = [0, 0], sizes = [2, 64], strides = [1, 1]} : vector<2x128xf32> to vector<2x64xf32>
    %236 = vector.extract_strided_slice %234 {offsets = [0, 64], sizes = [2, 64], strides = [1, 1]} : vector<2x128xf32> to vector<2x64xf32>
    %237 = vector.extract_strided_slice %225 {offsets = [0, 128], sizes = [2, 64], strides = [1, 1]} : vector<2x192xf32> to vector<2x64xf32>
    %238 = vector.extract_strided_slice %226 {offsets = [0, 128], sizes = [2, 64], strides = [1, 1]} : vector<2x192xf32> to vector<2x64xf32>
    %239 = vector.broadcast %200 : vector<1x64xf32> to vector<2x64xf32>
    %240 = arith.addf %238, %239 : vector<2x64xf32>
    %241 = arith.mulf %235, %240 : vector<2x64xf32>
    %242 = arith.addf %237, %241 : vector<2x64xf32>
    %243 = math.tanh %242 : vector<2x64xf32>
    %244 = arith.subf %223, %243 : vector<2x64xf32>
    %245 = arith.mulf %236, %244 : vector<2x64xf32>
    %246 = arith.addf %243, %245 : vector<2x64xf32>
    %c2_53 = arith.constant 2 : index
    %c0_54 = arith.constant 0 : index
    %247 = vector.load %arg9[%c2_53, %c0_54] : memref<16x64xf32, #tpu.memory_space<vmem>>, vector<2x64xf32>
    tpu.vector_store %arg9[%c2_53, %c0_54], %246 {strides = array<i32>} : memref<16x64xf32, #tpu.memory_space<vmem>>, vector<2x64xf32>,
    %248 = vector.extract_strided_slice %198 {offsets = [4, 0], sizes = [2, 192], strides = [1, 1]} : vector<16x192xf32> to vector<2x192xf32>
    %cst_55 = arith.constant dense<0.000000e+00> : vector<2x192xf32>
    %249 = tpu.matmul %246, %199, %cst_55 {dimension_numbers = #tpu.dot_dimension_numbers<[1], [0], [0], [1], [0, 0, 1, 1], [], []>} : vector<2x64xf32>, vector<64x192xf32>, vector<2x192xf32> -> vector<2x192xf32>
    %250 = vector.extract_strided_slice %248 {offsets = [0, 0], sizes = [2, 128], strides = [1, 1]} : vector<2x192xf32> to vector<2x128xf32>
    %251 = vector.extract_strided_slice %249 {offsets = [0, 0], sizes = [2, 128], strides = [1, 1]} : vector<2x192xf32> to vector<2x128xf32>
    %252 = arith.addf %250, %251 : vector<2x128xf32>
    %253 = arith.negf %252 : vector<2x128xf32>
    %254 = math.exp %253 : vector<2x128xf32>
    %cst_56 = arith.constant 1.000000e+00 : f32
    %255 = vector.broadcast %cst_56 : f32 to vector<2x128xf32>
    %256 = arith.addf %255, %254 : vector<2x128xf32>
    %257 = arith.divf %255, %256 : vector<2x128xf32>
    %258 = vector.extract_strided_slice %257 {offsets = [0, 0], sizes = [2, 64], strides = [1, 1]} : vector<2x128xf32> to vector<2x64xf32>
    %259 = vector.extract_strided_slice %257 {offsets = [0, 64], sizes = [2, 64], strides = [1, 1]} : vector<2x128xf32> to vector<2x64xf32>
    %260 = vector.extract_strided_slice %248 {offsets = [0, 128], sizes = [2, 64], strides = [1, 1]} : vector<2x192xf32> to vector<2x64xf32>
    %261 = vector.extract_strided_slice %249 {offsets = [0, 128], sizes = [2, 64], strides = [1, 1]} : vector<2x192xf32> to vector<2x64xf32>
    %262 = vector.broadcast %200 : vector<1x64xf32> to vector<2x64xf32>
    %263 = arith.addf %261, %262 : vector<2x64xf32>
    %264 = arith.mulf %258, %263 : vector<2x64xf32>
    %265 = arith.addf %260, %264 : vector<2x64xf32>
    %266 = math.tanh %265 : vector<2x64xf32>
    %267 = arith.subf %246, %266 : vector<2x64xf32>
    %268 = arith.mulf %259, %267 : vector<2x64xf32>
    %269 = arith.addf %266, %268 : vector<2x64xf32>
    %c4_57 = arith.constant 4 : index
    %c0_58 = arith.constant 0 : index
    %270 = vector.load %arg9[%c4_57, %c0_58] : memref<16x64xf32, #tpu.memory_space<vmem>>, vector<2x64xf32>
    tpu.vector_store %arg9[%c4_57, %c0_58], %269 {strides = array<i32>} : memref<16x64xf32, #tpu.memory_space<vmem>>, vector<2x64xf32>,
    %271 = vector.extract_strided_slice %198 {offsets = [6, 0], sizes = [2, 192], strides = [1, 1]} : vector<16x192xf32> to vector<2x192xf32>
    %cst_59 = arith.constant dense<0.000000e+00> : vector<2x192xf32>
    %272 = tpu.matmul %269, %199, %cst_59 {dimension_numbers = #tpu.dot_dimension_numbers<[1], [0], [0], [1], [0, 0, 1, 1], [], []>} : vector<2x64xf32>, vector<64x192xf32>, vector<2x192xf32> -> vector<2x192xf32>
    %273 = vector.extract_strided_slice %271 {offsets = [0, 0], sizes = [2, 128], strides = [1, 1]} : vector<2x192xf32> to vector<2x128xf32>
    %274 = vector.extract_strided_slice %272 {offsets = [0, 0], sizes = [2, 128], strides = [1, 1]} : vector<2x192xf32> to vector<2x128xf32>
    %275 = arith.addf %273, %274 : vector<2x128xf32>
    %276 = arith.negf %275 : vector<2x128xf32>
    %277 = math.exp %276 : vector<2x128xf32>
    %cst_60 = arith.constant 1.000000e+00 : f32
    %278 = vector.broadcast %cst_60 : f32 to vector<2x128xf32>
    %279 = arith.addf %278, %277 : vector<2x128xf32>
    %280 = arith.divf %278, %279 : vector<2x128xf32>
    %281 = vector.extract_strided_slice %280 {offsets = [0, 0], sizes = [2, 64], strides = [1, 1]} : vector<2x128xf32> to vector<2x64xf32>
    %282 = vector.extract_strided_slice %280 {offsets = [0, 64], sizes = [2, 64], strides = [1, 1]} : vector<2x128xf32> to vector<2x64xf32>
    %283 = vector.extract_strided_slice %271 {offsets = [0, 128], sizes = [2, 64], strides = [1, 1]} : vector<2x192xf32> to vector<2x64xf32>
    %284 = vector.extract_strided_slice %272 {offsets = [0, 128], sizes = [2, 64], strides = [1, 1]} : vector<2x192xf32> to vector<2x64xf32>
    %285 = vector.broadcast %200 : vector<1x64xf32> to vector<2x64xf32>
    %286 = arith.addf %284, %285 : vector<2x64xf32>
    %287 = arith.mulf %281, %286 : vector<2x64xf32>
    %288 = arith.addf %283, %287 : vector<2x64xf32>
    %289 = math.tanh %288 : vector<2x64xf32>
    %290 = arith.subf %269, %289 : vector<2x64xf32>
    %291 = arith.mulf %282, %290 : vector<2x64xf32>
    %292 = arith.addf %289, %291 : vector<2x64xf32>
    %c6_61 = arith.constant 6 : index
    %c0_62 = arith.constant 0 : index
    %293 = vector.load %arg9[%c6_61, %c0_62] : memref<16x64xf32, #tpu.memory_space<vmem>>, vector<2x64xf32>
    tpu.vector_store %arg9[%c6_61, %c0_62], %292 {strides = array<i32>} : memref<16x64xf32, #tpu.memory_space<vmem>>, vector<2x64xf32>,
    %294 = vector.extract_strided_slice %198 {offsets = [8, 0], sizes = [2, 192], strides = [1, 1]} : vector<16x192xf32> to vector<2x192xf32>
    %cst_63 = arith.constant dense<0.000000e+00> : vector<2x192xf32>
    %295 = tpu.matmul %292, %199, %cst_63 {dimension_numbers = #tpu.dot_dimension_numbers<[1], [0], [0], [1], [0, 0, 1, 1], [], []>} : vector<2x64xf32>, vector<64x192xf32>, vector<2x192xf32> -> vector<2x192xf32>
    %296 = vector.extract_strided_slice %294 {offsets = [0, 0], sizes = [2, 128], strides = [1, 1]} : vector<2x192xf32> to vector<2x128xf32>
    %297 = vector.extract_strided_slice %295 {offsets = [0, 0], sizes = [2, 128], strides = [1, 1]} : vector<2x192xf32> to vector<2x128xf32>
    %298 = arith.addf %296, %297 : vector<2x128xf32>
    %299 = arith.negf %298 : vector<2x128xf32>
    %300 = math.exp %299 : vector<2x128xf32>
    %cst_64 = arith.constant 1.000000e+00 : f32
    %301 = vector.broadcast %cst_64 : f32 to vector<2x128xf32>
    %302 = arith.addf %301, %300 : vector<2x128xf32>
    %303 = arith.divf %301, %302 : vector<2x128xf32>
    %304 = vector.extract_strided_slice %303 {offsets = [0, 0], sizes = [2, 64], strides = [1, 1]} : vector<2x128xf32> to vector<2x64xf32>
    %305 = vector.extract_strided_slice %303 {offsets = [0, 64], sizes = [2, 64], strides = [1, 1]} : vector<2x128xf32> to vector<2x64xf32>
    %306 = vector.extract_strided_slice %294 {offsets = [0, 128], sizes = [2, 64], strides = [1, 1]} : vector<2x192xf32> to vector<2x64xf32>
    %307 = vector.extract_strided_slice %295 {offsets = [0, 128], sizes = [2, 64], strides = [1, 1]} : vector<2x192xf32> to vector<2x64xf32>
    %308 = vector.broadcast %200 : vector<1x64xf32> to vector<2x64xf32>
    %309 = arith.addf %307, %308 : vector<2x64xf32>
    %310 = arith.mulf %304, %309 : vector<2x64xf32>
    %311 = arith.addf %306, %310 : vector<2x64xf32>
    %312 = math.tanh %311 : vector<2x64xf32>
    %313 = arith.subf %292, %312 : vector<2x64xf32>
    %314 = arith.mulf %305, %313 : vector<2x64xf32>
    %315 = arith.addf %312, %314 : vector<2x64xf32>
    %c8_65 = arith.constant 8 : index
    %c0_66 = arith.constant 0 : index
    %316 = vector.load %arg9[%c8_65, %c0_66] : memref<16x64xf32, #tpu.memory_space<vmem>>, vector<2x64xf32>
    tpu.vector_store %arg9[%c8_65, %c0_66], %315 {strides = array<i32>} : memref<16x64xf32, #tpu.memory_space<vmem>>, vector<2x64xf32>,
    %317 = vector.extract_strided_slice %198 {offsets = [10, 0], sizes = [2, 192], strides = [1, 1]} : vector<16x192xf32> to vector<2x192xf32>
    %cst_67 = arith.constant dense<0.000000e+00> : vector<2x192xf32>
    %318 = tpu.matmul %315, %199, %cst_67 {dimension_numbers = #tpu.dot_dimension_numbers<[1], [0], [0], [1], [0, 0, 1, 1], [], []>} : vector<2x64xf32>, vector<64x192xf32>, vector<2x192xf32> -> vector<2x192xf32>
    %319 = vector.extract_strided_slice %317 {offsets = [0, 0], sizes = [2, 128], strides = [1, 1]} : vector<2x192xf32> to vector<2x128xf32>
    %320 = vector.extract_strided_slice %318 {offsets = [0, 0], sizes = [2, 128], strides = [1, 1]} : vector<2x192xf32> to vector<2x128xf32>
    %321 = arith.addf %319, %320 : vector<2x128xf32>
    %322 = arith.negf %321 : vector<2x128xf32>
    %323 = math.exp %322 : vector<2x128xf32>
    %cst_68 = arith.constant 1.000000e+00 : f32
    %324 = vector.broadcast %cst_68 : f32 to vector<2x128xf32>
    %325 = arith.addf %324, %323 : vector<2x128xf32>
    %326 = arith.divf %324, %325 : vector<2x128xf32>
    %327 = vector.extract_strided_slice %326 {offsets = [0, 0], sizes = [2, 64], strides = [1, 1]} : vector<2x128xf32> to vector<2x64xf32>
    %328 = vector.extract_strided_slice %326 {offsets = [0, 64], sizes = [2, 64], strides = [1, 1]} : vector<2x128xf32> to vector<2x64xf32>
    %329 = vector.extract_strided_slice %317 {offsets = [0, 128], sizes = [2, 64], strides = [1, 1]} : vector<2x192xf32> to vector<2x64xf32>
    %330 = vector.extract_strided_slice %318 {offsets = [0, 128], sizes = [2, 64], strides = [1, 1]} : vector<2x192xf32> to vector<2x64xf32>
    %331 = vector.broadcast %200 : vector<1x64xf32> to vector<2x64xf32>
    %332 = arith.addf %330, %331 : vector<2x64xf32>
    %333 = arith.mulf %327, %332 : vector<2x64xf32>
    %334 = arith.addf %329, %333 : vector<2x64xf32>
    %335 = math.tanh %334 : vector<2x64xf32>
    %336 = arith.subf %315, %335 : vector<2x64xf32>
    %337 = arith.mulf %328, %336 : vector<2x64xf32>
    %338 = arith.addf %335, %337 : vector<2x64xf32>
    %c10_69 = arith.constant 10 : index
    %c0_70 = arith.constant 0 : index
    %339 = vector.load %arg9[%c10_69, %c0_70] : memref<16x64xf32, #tpu.memory_space<vmem>>, vector<2x64xf32>
    tpu.vector_store %arg9[%c10_69, %c0_70], %338 {strides = array<i32>} : memref<16x64xf32, #tpu.memory_space<vmem>>, vector<2x64xf32>,
    %340 = vector.extract_strided_slice %198 {offsets = [12, 0], sizes = [2, 192], strides = [1, 1]} : vector<16x192xf32> to vector<2x192xf32>
    %cst_71 = arith.constant dense<0.000000e+00> : vector<2x192xf32>
    %341 = tpu.matmul %338, %199, %cst_71 {dimension_numbers = #tpu.dot_dimension_numbers<[1], [0], [0], [1], [0, 0, 1, 1], [], []>} : vector<2x64xf32>, vector<64x192xf32>, vector<2x192xf32> -> vector<2x192xf32>
    %342 = vector.extract_strided_slice %340 {offsets = [0, 0], sizes = [2, 128], strides = [1, 1]} : vector<2x192xf32> to vector<2x128xf32>
    %343 = vector.extract_strided_slice %341 {offsets = [0, 0], sizes = [2, 128], strides = [1, 1]} : vector<2x192xf32> to vector<2x128xf32>
    %344 = arith.addf %342, %343 : vector<2x128xf32>
    %345 = arith.negf %344 : vector<2x128xf32>
    %346 = math.exp %345 : vector<2x128xf32>
    %cst_72 = arith.constant 1.000000e+00 : f32
    %347 = vector.broadcast %cst_72 : f32 to vector<2x128xf32>
    %348 = arith.addf %347, %346 : vector<2x128xf32>
    %349 = arith.divf %347, %348 : vector<2x128xf32>
    %350 = vector.extract_strided_slice %349 {offsets = [0, 0], sizes = [2, 64], strides = [1, 1]} : vector<2x128xf32> to vector<2x64xf32>
    %351 = vector.extract_strided_slice %349 {offsets = [0, 64], sizes = [2, 64], strides = [1, 1]} : vector<2x128xf32> to vector<2x64xf32>
    %352 = vector.extract_strided_slice %340 {offsets = [0, 128], sizes = [2, 64], strides = [1, 1]} : vector<2x192xf32> to vector<2x64xf32>
    %353 = vector.extract_strided_slice %341 {offsets = [0, 128], sizes = [2, 64], strides = [1, 1]} : vector<2x192xf32> to vector<2x64xf32>
    %354 = vector.broadcast %200 : vector<1x64xf32> to vector<2x64xf32>
    %355 = arith.addf %353, %354 : vector<2x64xf32>
    %356 = arith.mulf %350, %355 : vector<2x64xf32>
    %357 = arith.addf %352, %356 : vector<2x64xf32>
    %358 = math.tanh %357 : vector<2x64xf32>
    %359 = arith.subf %338, %358 : vector<2x64xf32>
    %360 = arith.mulf %351, %359 : vector<2x64xf32>
    %361 = arith.addf %358, %360 : vector<2x64xf32>
    %c12_73 = arith.constant 12 : index
    %c0_74 = arith.constant 0 : index
    %362 = vector.load %arg9[%c12_73, %c0_74] : memref<16x64xf32, #tpu.memory_space<vmem>>, vector<2x64xf32>
    tpu.vector_store %arg9[%c12_73, %c0_74], %361 {strides = array<i32>} : memref<16x64xf32, #tpu.memory_space<vmem>>, vector<2x64xf32>,
    %363 = vector.extract_strided_slice %198 {offsets = [14, 0], sizes = [2, 192], strides = [1, 1]} : vector<16x192xf32> to vector<2x192xf32>
    %cst_75 = arith.constant dense<0.000000e+00> : vector<2x192xf32>
    %364 = tpu.matmul %361, %199, %cst_75 {dimension_numbers = #tpu.dot_dimension_numbers<[1], [0], [0], [1], [0, 0, 1, 1], [], []>} : vector<2x64xf32>, vector<64x192xf32>, vector<2x192xf32> -> vector<2x192xf32>
    %365 = vector.extract_strided_slice %363 {offsets = [0, 0], sizes = [2, 128], strides = [1, 1]} : vector<2x192xf32> to vector<2x128xf32>
    %366 = vector.extract_strided_slice %364 {offsets = [0, 0], sizes = [2, 128], strides = [1, 1]} : vector<2x192xf32> to vector<2x128xf32>
    %367 = arith.addf %365, %366 : vector<2x128xf32>
    %368 = arith.negf %367 : vector<2x128xf32>
    %369 = math.exp %368 : vector<2x128xf32>
    %cst_76 = arith.constant 1.000000e+00 : f32
    %370 = vector.broadcast %cst_76 : f32 to vector<2x128xf32>
    %371 = arith.addf %370, %369 : vector<2x128xf32>
    %372 = arith.divf %370, %371 : vector<2x128xf32>
    %373 = vector.extract_strided_slice %372 {offsets = [0, 0], sizes = [2, 64], strides = [1, 1]} : vector<2x128xf32> to vector<2x64xf32>
    %374 = vector.extract_strided_slice %372 {offsets = [0, 64], sizes = [2, 64], strides = [1, 1]} : vector<2x128xf32> to vector<2x64xf32>
    %375 = vector.extract_strided_slice %363 {offsets = [0, 128], sizes = [2, 64], strides = [1, 1]} : vector<2x192xf32> to vector<2x64xf32>
    %376 = vector.extract_strided_slice %364 {offsets = [0, 128], sizes = [2, 64], strides = [1, 1]} : vector<2x192xf32> to vector<2x64xf32>
    %377 = vector.broadcast %200 : vector<1x64xf32> to vector<2x64xf32>
    %378 = arith.addf %376, %377 : vector<2x64xf32>
    %379 = arith.mulf %373, %378 : vector<2x64xf32>
    %380 = arith.addf %375, %379 : vector<2x64xf32>
    %381 = math.tanh %380 : vector<2x64xf32>
    %382 = arith.subf %361, %381 : vector<2x64xf32>
    %383 = arith.mulf %374, %382 : vector<2x64xf32>
    %384 = arith.addf %381, %383 : vector<2x64xf32>
    %c14_77 = arith.constant 14 : index
    %c0_78 = arith.constant 0 : index
    %385 = vector.load %arg9[%c14_77, %c0_78] : memref<16x64xf32, #tpu.memory_space<vmem>>, vector<2x64xf32>
    tpu.vector_store %arg9[%c14_77, %c0_78], %384 {strides = array<i32>} : memref<16x64xf32, #tpu.memory_space<vmem>>, vector<2x64xf32>,
    return
  }
}

</mosaic_0001>

<llo_original>
// kernel: climate_gru_forward.1
$region0: #{climate_gru_forward.1}
  #allocation0 [shape = 'u32[]', space=smem, size = 0x4, offset = 0x4, fixed_abs, tag = 'smem constant byte address 0x4 - core index']
  #allocation1 [shape = 'u32[144,128]{1,0:T(1,128)}', space=vmem, size = 0x12000, scoped, tag = 'internal scratch']
  #allocation2 [shape = 'f32[16,64]{1,0:T(8,128)}', space=vmem, size = 0x2000, scoped, tag = 'scratch operand']
  %s0 = inlined_call_operand.vmem [shape: f32[16,11], index: 0, kind: input, shape index: {}]
  %s1 = inlined_call_operand.vmem [shape: f32[11,192], index: 1, kind: input, shape index: {}]
  %s2 = inlined_call_operand.vmem [shape: f32[1,192], index: 2, kind: input, shape index: {}]
  %s3 = inlined_call_operand.hbm [shape: f32[64,192], index: 3, kind: input, shape index: {}]
  %s4 = inlined_call_operand.vmem [shape: f32[1,64], index: 4, kind: input, shape index: {}]
  %s5 = inlined_call_operand.hbm [shape: f32[64,192], index: 5, kind: input, shape index: {}]
  %s6 = inlined_call_operand.vmem [shape: f32[1,192], index: 6, kind: input, shape index: {}]
  %s7 = inlined_call_operand.hbm [shape: f32[64,192], index: 7, kind: input, shape index: {}]
  %s8 = inlined_call_operand.vmem [shape: f32[1,64], index: 8, kind: input, shape index: {}]
  %s9 = inlined_call_operand.vmem [shape: f32[16,64], index: 9, kind: output, shape index: {}]
  %s10 = sld [smem:[#allocation0]]
  $region58: #{climate_gru_forward.1} parent=0
    _
  %s12 = ssub.s32 1, %s10
  %s13 = scalar_select 0, %s12, %s10
  $region1: #{climate_gru_forward.1} parent=0
    #allocation3 [shape = 'u8[65536]{0}', space=vmem, size = 0x10000, scoped, tag = 'input window, operand 3, single buffered']
    #allocation4 [shape = 's32[1]{0}', space=sflag, size = 0x4, scoped, tag = 'scoped memory for climate_gru_forward.1']
    #allocation5 [shape = 'u8[65536]{0}', space=vmem, size = 0x10000, scoped, tag = 'input window, operand 5, single buffered']
    #allocation6 [shape = 's32[1]{0}', space=sflag, size = 0x4, scoped, tag = 'scoped memory for climate_gru_forward.1']
    #allocation7 [shape = 'u8[65536]{0}', space=vmem, size = 0x10000, scoped, tag = 'input window, operand 7, single buffered']
    %14 = vsyncpa [#allocation4], 0
    %15 = vsyncpa [#allocation6], 0
    // Predicated region
    $region2: #{climate_gru_forward.1} parent=1 // pred_check
      _
    $region3: #{climate_gru_forward.1} parent=1 // pred_check_branch
      %17 = sbr.rel (0) target = $region5
    $region4: #{climate_gru_forward.1} parent=1 // pred_region
      _
    $region5: #{climate_gru_forward.1} parent=1 // pred_fallthru
      _
    // Predicated region
    $region6: #{climate_gru_forward.1} parent=1 // pred_check
      _
    $region7: #{climate_gru_forward.1} parent=1 // pred_check_branch
      %19 = sbr.rel (0) target = $region9
    $region8: #{climate_gru_forward.1} parent=1 // pred_region
      _
    $region9: #{climate_gru_forward.1} parent=1 // pred_fallthru
      _
    // Predicated region
    $region10: #{climate_gru_forward.1} parent=1 // pred_check
      _
    $region11: #{climate_gru_forward.1} parent=1 // pred_check_branch
      %21 = sbr.rel (0) target = $region13
    $region12: #{climate_gru_forward.1} parent=1 // pred_region
      _
    $region13: #{climate_gru_forward.1} parent=1 // pred_fallthru
      _
    // Predicated region
    $region14: #{climate_gru_forward.1} parent=1 // pred_check
      _
    $region15: #{climate_gru_forward.1} parent=1 // pred_check_branch
      %23 = sbr.rel (0) target = $region17
    $region16: #{climate_gru_forward.1} parent=1 // pred_region
      %s25 = ssub.s32 2048, 2048
      %26 = vsyncadd [#allocation4], %s25
      %s27 = sshll.u32 [#allocation3], 4
      %s28 = int_to_ptr.vmem [resolvable:$true] %s27
      %33 = dma.hbm_to_vmem [thread:$0]  %s3, 2048, %s28, [#allocation4], 256, 256, 16
    $region17: #{climate_gru_forward.1} parent=1 // pred_fallthru
      _
    // Predicated region
    $region18: #{climate_gru_forward.1} parent=1 // pred_check
      _
    $region19: #{climate_gru_forward.1} parent=1 // pred_check_branch
      %35 = sbr.rel (0) target = $region21
    $region20: #{climate_gru_forward.1} parent=1 // pred_region
      _
    $region21: #{climate_gru_forward.1} parent=1 // pred_fallthru
      _
    // Predicated region
    $region22: #{climate_gru_forward.1} parent=1 // pred_check
      _
    $region23: #{climate_gru_forward.1} parent=1 // pred_check_branch
      %37 = sbr.rel (0) target = $region25
    $region24: #{climate_gru_forward.1} parent=1 // pred_region
      %s39 = ssub.s32 2048, 2048
      %40 = vsyncadd [#allocation6], %s39
      %s41 = sshll.u32 [#allocation5], 4
      %s42 = int_to_ptr.vmem [resolvable:$true] %s41
      %47 = dma.hbm_to_vmem [thread:$0]  %s5, 2048, %s42, [#allocation6], 256, 256, 16
    $region25: #{climate_gru_forward.1} parent=1 // pred_fallthru
      _
    // Predicated region
    $region26: #{climate_gru_forward.1} parent=1 // pred_check
      _
    $region27: #{climate_gru_forward.1} parent=1 // pred_check_branch
      %49 = sbr.rel (0) target = $region29
    $region28: #{climate_gru_forward.1} parent=1 // pred_region
      _
    $region29: #{climate_gru_forward.1} parent=1 // pred_fallthru
      _
    // Predicated region
    $region30: #{climate_gru_forward.1} parent=1 // pred_check
      _
    $region31: #{climate_gru_forward.1} parent=1 // pred_check_branch
      %51 = sbr.rel (0) target = $region33
    $region32: #{climate_gru_forward.1} parent=1 // pred_region
      %s53 = ssub.s32 2048, 2048
      %54 = vsyncadd [#allocation6], %s53
      %s55 = sshll.u32 [#allocation7], 4
      %s56 = int_to_ptr.vmem [resolvable:$true] %s55
      %61 = dma.hbm_to_vmem [thread:$0]  %s7, 2048, %s56, [#allocation6], 256, 256, 16
    $region33: #{climate_gru_forward.1} parent=1 // pred_fallthru
      _
    // Predicated region
    $region34: #{climate_gru_forward.1} parent=1 // pred_check
      _
    $region35: #{climate_gru_forward.1} parent=1 // pred_check_branch
      %63 = sbr.rel (0) target = $region37
    $region36: #{climate_gru_forward.1} parent=1 // pred_region
      _
    $region37: #{climate_gru_forward.1} parent=1 // pred_fallthru
      _
    // Predicated region
    $region38: #{climate_gru_forward.1} parent=1 // pred_check
      _
    $region39: #{climate_gru_forward.1} parent=1 // pred_check_branch
      %65 = sbr.rel (0) target = $region41
    $region40: #{climate_gru_forward.1} parent=1 // pred_region
      %66 = dma.done [#allocation4], 2048
    $region41: #{climate_gru_forward.1} parent=1 // pred_fallthru
      _
    // Predicated region
    $region42: #{climate_gru_forward.1} parent=1 // pred_check
      _
    $region43: #{climate_gru_forward.1} parent=1 // pred_check_branch
      %68 = sbr.rel (0) target = $region45
    $region44: #{climate_gru_forward.1} parent=1 // pred_region
      %69 = dma.done [#allocation6], 2048
    $region45: #{climate_gru_forward.1} parent=1 // pred_fallthru
      _
    // Predicated region
    $region46: #{climate_gru_forward.1} parent=1 // pred_check
      _
    $region47: #{climate_gru_forward.1} parent=1 // pred_check_branch
      %71 = sbr.rel (0) target = $region49
    $region48: #{climate_gru_forward.1} parent=1 // pred_region
      %72 = dma.done [#allocation6], 2048
    $region49: #{climate_gru_forward.1} parent=1 // pred_fallthru
      _
    %v73 = vld [vmem:[%s0] sm:$0xff]
    %v74 = vld [vmem:[%s0 + $0x8] sm:$0xff]
    %v75 = vld [vmem:[%s1] sm:$0xff]
    %v76 = vld [vmem:[%s1 + $0x8] sm:$0xff]
    %v77 = vld [vmem:[%s1 + $0x10] sm:$0x7]
    %v78 = vld [vmem:[%s1 + $0x18] sm:$0x7]
    %v79 = vld [vmem:[%s2] sm:$0x3]
    %v81 = vlaneseq
    %v82 = vshrl.u32 %v81, 7
    %v83 = vsub.s32 0, %v82
    %v84 = vrot.slane %v79, %v83
    %v85 = vlaneseq
    %v86 = vshrl.u32 %v85, 7
    %v87 = vsub.s32 1, %v86
    %v88 = vrot.slane %v79, %v87
    %vm91 = vcmask 89088
    %v93 = vsel %vm91, %v73, 0
    %v96 = vsel %vm91, %v74, 0
    %vm98 = vcmask 1042432
    %v100 = vsel %vm98, %v77, 0
    %v103 = vsel %vm98, %v78, 0
    %105 = vmatprep.subr.mxu0 %v76
    %106 = vmatpush1.msra.mxu0 %v75
    %107 = vmatprep.subr.mxu0 %v103
    %108 = vmatpush1.msra.mxu0 %v100
    %109 = vmatprep.subr.mxu0 0.0
    %110 = vmatpush1.msra.mxu0 0.0
    %111 = vmatprep.subr.mxu0 0.0
    %112 = vmatpush1.msra.mxu0 0.0
    %113 = vmatprep.subr.mxu0 0.0
    %114 = vmatpush1.msra.mxu0 0.0
    %115 = vmatprep.subr.mxu0 0.0
    %116 = vmatpush1.msra.mxu0 0.0
    %117 = vmatprep.subr.mxu0 0.0
    %118 = vmatpush1.msra.mxu0 0.0
    %119 = vmatprep.subr.mxu0 0.0
    %120 = vmatpush1.msra.mxu0 0.0
    %121 = vmatprep.subr.mxu0 0.0
    %122 = vmatpush1.msra.mxu0 0.0
    %123 = vmatprep.subr.mxu0 0.0
    %124 = vmatpush1.msra.mxu0 0.0
    %125 = vmatprep.subr.mxu0 0.0
    %126 = vmatpush1.msra.mxu0 0.0
    %127 = vmatprep.subr.mxu0 0.0
    %128 = vmatpush1.msra.mxu0 0.0
    %129 = vmatprep.subr.mxu0 0.0
    %130 = vmatpush1.msra.mxu0 0.0
    %131 = vmatprep.subr.mxu0 0.0
    %132 = vmatpush1.msra.mxu0 0.0
    %133 = vmatprep.subr.mxu0 0.0
    %134 = vmatpush1.msra.mxu0 0.0
    %135 = vmatprep.subr.mxu0 0.0
    %136 = vmatpush1.msra.mxu0 0.0
    %137 = vmatprep.subr.mxu0 0.0
    %138 = vmatpush1.msra.mxu0 0.0
    %139 = vmatprep.subr.mxu0 0.0
    %140 = vmatpush1.msra.mxu0 0.0
    %141 = vmatprep.subr.mxu0 0.0
    %142 = vmatpush1.msra.mxu0 0.0
    %143 = vmatprep.subr.mxu0 0.0
    %144 = vmatpush1.msra.mxu0 0.0
    %145 = vmatprep.subr.mxu0 0.0
    %146 = vmatpush1.msra.mxu0 0.0
    %147 = vmatprep.subr.mxu0 0.0
    %148 = vmatpush1.msra.mxu0 0.0
    %149 = vmatprep.subr.mxu0 0.0
    %150 = vmatpush1.msra.mxu0 0.0
    %151 = vmatprep.subr.mxu0 0.0
    %152 = vmatpush1.msra.mxu0 0.0
    %153 = vmatprep.subr.mxu0 0.0
    %154 = vmatpush1.msra.mxu0 0.0
    %155 = vmatprep.subr.mxu0 0.0
    %156 = vmatpush1.msra.mxu0 0.0
    %157 = vmatprep.subr.mxu0 0.0
    %158 = vmatpush1.msra.mxu0 0.0
    %159 = vmatprep.subr.mxu0 0.0
    %160 = vmatpush1.msra.mxu0 0.0
    %161 = vmatprep.subr.mxu0 0.0
    %162 = vmatpush1.msra.mxu0 0.0
    %163 = vmatprep.subr.mxu0 0.0
    %164 = vmatpush1.msra.mxu0 0.0
    %165 = vmatprep.subr.mxu0 0.0
    %166 = vmatpush1.msra.mxu0 0.0
    %167 = vmatprep.subr.mxu0 0.0
    %168 = vmatpush1.msra.mxu0 0.0
    %169 = vmatprep.mubr.f32.mxu0 0.0
    %170 = vmatmul.mubr.f32.gmra.mrb[0].mxu0 %v93
    %v171 = vpop.f32.mrb[0].mxu0
    %v172 = vadd.f32 %v84, %v171
    %v173 = vpop.f32.mrb[0].mxu0
    %v174 = vadd.f32 %v88, %v173
    %175 = vmatprep.mubr.f32.mxu0 0.0
    %176 = vmatmul.mubr.f32.gmra.mrb[0].mxu0 %v96
    %v177 = vpop.f32.mrb[0].mxu0
    %v178 = vadd.f32 %v84, %v177
    %v179 = vpop.f32.mrb[0].mxu0
    %v180 = vadd.f32 %v88, %v179
    %181 = vdwg.mxu0
    %v182 = vld [vmem:[#allocation3] sm:$0xff]
    %v183 = vld [vmem:[#allocation3 + $0x8] sm:$0xff]
    %v184 = vld [vmem:[#allocation3 + $0x10] sm:$0xff]
    %v185 = vld [vmem:[#allocation3 + $0x18] sm:$0xff]
    %v186 = vld [vmem:[#allocation3 + $0x20] sm:$0xff]
    %v187 = vld [vmem:[#allocation3 + $0x28] sm:$0xff]
    %v188 = vld [vmem:[#allocation3 + $0x30] sm:$0xff]
    %v189 = vld [vmem:[#allocation3 + $0x38] sm:$0xff]
    %v190 = vld [vmem:[#allocation3 + $0x40] sm:$0xff]
    %v191 = vld [vmem:[#allocation3 + $0x48] sm:$0xff]
    %v192 = vld [vmem:[#allocation3 + $0x50] sm:$0xff]
    %v193 = vld [vmem:[#allocation3 + $0x58] sm:$0xff]
    %v194 = vld [vmem:[#allocation3 + $0x60] sm:$0xff]
    %v195 = vld [vmem:[#allocation3 + $0x68] sm:$0xff]
    %v196 = vld [vmem:[#allocation3 + $0x70] sm:$0xff]
    %v197 = vld [vmem:[#allocation3 + $0x78] sm:$0xff]
    %v198 = vld [vmem:[%s4] sm:$0x1]
    %vm199 = vcmask 523264
    %v201 = vsel %vm199, 0.0, 0
    %203 = vmatprep.subr.mxu0 %v183
    %204 = vmatpush1.msra.mxu0 %v182
    %205 = vmatprep.subr.mxu0 %v185
    %206 = vmatpush1.msra.mxu0 %v184
    %207 = vmatprep.subr.mxu0 %v187
    %208 = vmatpush1.msra.mxu0 %v186
    %209 = vmatprep.subr.mxu0 %v189
    %210 = vmatpush1.msra.mxu0 %v188
    %211 = vmatprep.subr.mxu0 %v191
    %212 = vmatpush1.msra.mxu0 %v190
    %213 = vmatprep.subr.mxu0 %v193
    %214 = vmatpush1.msra.mxu0 %v192
    %215 = vmatprep.subr.mxu0 %v195
    %216 = vmatpush1.msra.mxu0 %v194
    %217 = vmatprep.subr.mxu0 %v197
    %218 = vmatpush1.msra.mxu0 %v196
    %219 = vmatprep.subr.mxu0 0.0
    %220 = vmatpush1.msra.mxu0 0.0
    %221 = vmatprep.subr.mxu0 0.0
    %222 = vmatpush1.msra.mxu0 0.0
    %223 = vmatprep.subr.mxu0 0.0
    %224 = vmatpush1.msra.mxu0 0.0
    %225 = vmatprep.subr.mxu0 0.0
    %226 = vmatpush1.msra.mxu0 0.0
    %227 = vmatprep.subr.mxu0 0.0
    %228 = vmatpush1.msra.mxu0 0.0
    %229 = vmatprep.subr.mxu0 0.0
    %230 = vmatpush1.msra.mxu0 0.0
    %231 = vmatprep.subr.mxu0 0.0
    %232 = vmatpush1.msra.mxu0 0.0
    %233 = vmatprep.subr.mxu0 0.0
    %234 = vmatpush1.msra.mxu0 0.0
    %235 = vmatprep.subr.mxu0 0.0
    %236 = vmatpush1.msra.mxu0 0.0
    %237 = vmatprep.subr.mxu0 0.0
    %238 = vmatpush1.msra.mxu0 0.0
    %239 = vmatprep.subr.mxu0 0.0
    %240 = vmatpush1.msra.mxu0 0.0
    %241 = vmatprep.subr.mxu0 0.0
    %242 = vmatpush1.msra.mxu0 0.0
    %243 = vmatprep.subr.mxu0 0.0
    %244 = vmatpush1.msra.mxu0 0.0
    %245 = vmatprep.subr.mxu0 0.0
    %246 = vmatpush1.msra.mxu0 0.0
    %247 = vmatprep.subr.mxu0 0.0
    %248 = vmatpush1.msra.mxu0 0.0
    %249 = vmatprep.subr.mxu0 0.0
    %250 = vmatpush1.msra.mxu0 0.0
    %251 = vmatprep.subr.mxu0 0.0
    %252 = vmatpush1.msra.mxu0 0.0
    %253 = vmatprep.subr.mxu0 0.0
    %254 = vmatpush1.msra.mxu0 0.0
    %255 = vmatprep.subr.mxu0 0.0
    %256 = vmatpush1.msra.mxu0 0.0
    %257 = vmatprep.subr.mxu0 0.0
    %258 = vmatpush1.msra.mxu0 0.0
    %259 = vmatprep.subr.mxu0 0.0
    %260 = vmatpush1.msra.mxu0 0.0
    %261 = vmatprep.subr.mxu0 0.0
    %262 = vmatpush1.msra.mxu0 0.0
    %263 = vmatprep.subr.mxu0 0.0
    %264 = vmatpush1.msra.mxu0 0.0
    %265 = vmatprep.subr.mxu0 0.0
    %266 = vmatpush1.msra.mxu0 0.0
    %267 = vmatprep.mubr.f32.mxu0 0.0
    %268 = vmatmul.mubr.f32.gmra.mrb[0].mxu0 %v201
    %v269 = vpop.f32.mrb[0].mxu0
    %v270 = vadd.f32 0.0, %v269
    %v271 = vpop.f32.mrb[0].mxu0
    %v272 = vadd.f32 0.0, %v271
    %273 = vdwg.mxu0
    %v274 = vadd.f32 %v172, %v270
    %v275 = vxor.u32 %v274, 2147483648
    %v276 = vmul.f32 %v275, 1.442695
    %v277 = vpow.pop %v276
    %v278 = vadd.f32 %v277, 1.0
    %v279 = vrcp.pop %v278
    %v280 = vmul.f32 1.0, %v279
    %v282 = vlaneseq
    %v283 = vshrl.u32 %v282, 7
    %v284 = vsub.s32 0, %v283
    %v285 = vrot.slane %v198, %v284
    %v287 = vadd.f32 %v272, %v285
    %v288 = vmul.f32 %v280, %v287
    %v289 = vadd.f32 %v174, %v288
    %v290 = vtanh.pop %v289
    %v291 = vsub.f32 0.0, %v290
    %293 = vrot.lane.b32.xlu0 %v291, 64
    %v294 = vpop.permute.xlu0 %293
    %v296 = vmul.f32 %v280, %v294
    %298 = vrot.lane.b32.xlu0 %v296, 64
    %v299 = vpop.permute.xlu0 %298
    %v301 = vadd.f32 %v290, %v299
    %vm302 = vcmask 517120
    %303 = vst.msk [vmem:[#allocation2] sm:$0x3] %vm302, %v301
    %v305 = vsel %vm199, %v301, 0
    %307 = vmatprep.subr.mxu0 %v183
    %308 = vmatpush1.msra.mxu0 %v182
    %309 = vmatprep.subr.mxu0 %v185
    %310 = vmatpush1.msra.mxu0 %v184
    %311 = vmatprep.subr.mxu0 %v187
    %312 = vmatpush1.msra.mxu0 %v186
    %313 = vmatprep.subr.mxu0 %v189
    %314 = vmatpush1.msra.mxu0 %v188
    %315 = vmatprep.subr.mxu0 %v191
    %316 = vmatpush1.msra.mxu0 %v190
    %317 = vmatprep.subr.mxu0 %v193
    %318 = vmatpush1.msra.mxu0 %v192
    %319 = vmatprep.subr.mxu0 %v195
    %320 = vmatpush1.msra.mxu0 %v194
    %321 = vmatprep.subr.mxu0 %v197
    %322 = vmatpush1.msra.mxu0 %v196
    %323 = vmatprep.subr.mxu0 0.0
    %324 = vmatpush1.msra.mxu0 0.0
    %325 = vmatprep.subr.mxu0 0.0
    %326 = vmatpush1.msra.mxu0 0.0
    %327 = vmatprep.subr.mxu0 0.0
    %328 = vmatpush1.msra.mxu0 0.0
    %329 = vmatprep.subr.mxu0 0.0
    %330 = vmatpush1.msra.mxu0 0.0
    %331 = vmatprep.subr.mxu0 0.0
    %332 = vmatpush1.msra.mxu0 0.0
    %333 = vmatprep.subr.mxu0 0.0
    %334 = vmatpush1.msra.mxu0 0.0
    %335 = vmatprep.subr.mxu0 0.0
    %336 = vmatpush1.msra.mxu0 0.0
    %337 = vmatprep.subr.mxu0 0.0
    %338 = vmatpush1.msra.mxu0 0.0
    %339 = vmatprep.subr.mxu0 0.0
    %340 = vmatpush1.msra.mxu0 0.0
    %341 = vmatprep.subr.mxu0 0.0
    %342 = vmatpush1.msra.mxu0 0.0
    %343 = vmatprep.subr.mxu0 0.0
    %344 = vmatpush1.msra.mxu0 0.0
    %345 = vmatprep.subr.mxu0 0.0
    %346 = vmatpush1.msra.mxu0 0.0
    %347 = vmatprep.subr.mxu0 0.0
    %348 = vmatpush1.msra.mxu0 0.0
    %349 = vmatprep.subr.mxu0 0.0
    %350 = vmatpush1.msra.mxu0 0.0
    %351 = vmatprep.subr.mxu0 0.0
    %352 = vmatpush1.msra.mxu0 0.0
    %353 = vmatprep.subr.mxu0 0.0
    %354 = vmatpush1.msra.mxu0 0.0
    %355 = vmatprep.subr.mxu0 0.0
    %356 = vmatpush1.msra.mxu0 0.0
    %357 = vmatprep.subr.mxu0 0.0
    %358 = vmatpush1.msra.mxu0 0.0
    %359 = vmatprep.subr.mxu0 0.0
    %360 = vmatpush1.msra.mxu0 0.0
    %361 = vmatprep.subr.mxu0 0.0
    %362 = vmatpush1.msra.mxu0 0.0
    %363 = vmatprep.subr.mxu0 0.0
    %364 = vmatpush1.msra.mxu0 0.0
    %365 = vmatprep.subr.mxu0 0.0
    %366 = vmatpush1.msra.mxu0 0.0
    %367 = vmatprep.subr.mxu0 0.0
    %368 = vmatpush1.msra.mxu0 0.0
    %369 = vmatprep.subr.mxu0 0.0
    %370 = vmatpush1.msra.mxu0 0.0
    %371 = vmatprep.mubr.f32.mxu0 0.0
    %372 = vmatmul.mubr.f32.gmra.mrb[0].mxu0 %v305
    %v373 = vpop.f32.mrb[0].mxu0
    %v374 = vadd.f32 0.0, %v373
    %v375 = vpop.f32.mrb[0].mxu0
    %v376 = vadd.f32 0.0, %v375
    %377 = vdwg.mxu0
    %v379 = vrot.slane %v374, 6
    %v381 = vadd.f32 %v172, %v379
    %v382 = vxor.u32 %v381, 2147483648
    %v383 = vmul.f32 %v382, 1.442695
    %v384 = vpow.pop %v383
    %v385 = vadd.f32 %v384, 1.0
    %v386 = vrcp.pop %v385
    %v387 = vmul.f32 1.0, %v386
    %v388 = vadd.f32 %v376, %v285
    %v390 = vrot.slane %v388, 6
    %v392 = vmul.f32 %v387, %v390
    %v393 = vadd.f32 %v174, %v392
    %v394 = vtanh.pop %v393
    %v396 = vrot.slane %v394, 2
    %v398 = vsub.f32 %v301, %v396
    %v400 = vrot.slane %v398, 6
    %401 = vrot.lane.b32.xlu0 %v400, 64
    %v402 = vpop.permute.xlu0 %401
    %v404 = vmul.f32 %v387, %v402
    %406 = vrot.lane.b32.xlu0 %v404, 64
    %v407 = vpop.permute.xlu0 %406
    %v409 = vadd.f32 %v394, %v407
    %vm410 = vcmask 519170
    %411 = vst.msk [vmem:[#allocation2] sm:$0xc] %vm410, %v409
    %v413 = vrot.slane %v409, 2
    %v414 = vsel %vm199, %v413, 0
    %416 = vmatprep.subr.mxu0 %v183
    %417 = vmatpush1.msra.mxu0 %v182
    %418 = vmatprep.subr.mxu0 %v185
    %419 = vmatpush1.msra.mxu0 %v184
    %420 = vmatprep.subr.mxu0 %v187
    %421 = vmatpush1.msra.mxu0 %v186
    %422 = vmatprep.subr.mxu0 %v189
    %423 = vmatpush1.msra.mxu0 %v188
    %424 = vmatprep.subr.mxu0 %v191
    %425 = vmatpush1.msra.mxu0 %v190
    %426 = vmatprep.subr.mxu0 %v193
    %427 = vmatpush1.msra.mxu0 %v192
    %428 = vmatprep.subr.mxu0 %v195
    %429 = vmatpush1.msra.mxu0 %v194
    %430 = vmatprep.subr.mxu0 %v197
    %431 = vmatpush1.msra.mxu0 %v196
    %432 = vmatprep.subr.mxu0 0.0
    %433 = vmatpush1.msra.mxu0 0.0
    %434 = vmatprep.subr.mxu0 0.0
    %435 = vmatpush1.msra.mxu0 0.0
    %436 = vmatprep.subr.mxu0 0.0
    %437 = vmatpush1.msra.mxu0 0.0
    %438 = vmatprep.subr.mxu0 0.0
    %439 = vmatpush1.msra.mxu0 0.0
    %440 = vmatprep.subr.mxu0 0.0
    %441 = vmatpush1.msra.mxu0 0.0
    %442 = vmatprep.subr.mxu0 0.0
    %443 = vmatpush1.msra.mxu0 0.0
    %444 = vmatprep.subr.mxu0 0.0
    %445 = vmatpush1.msra.mxu0 0.0
    %446 = vmatprep.subr.mxu0 0.0
    %447 = vmatpush1.msra.mxu0 0.0
    %448 = vmatprep.subr.mxu0 0.0
    %449 = vmatpush1.msra.mxu0 0.0
    %450 = vmatprep.subr.mxu0 0.0
    %451 = vmatpush1.msra.mxu0 0.0
    %452 = vmatprep.subr.mxu0 0.0
    %453 = vmatpush1.msra.mxu0 0.0
    %454 = vmatprep.subr.mxu0 0.0
    %455 = vmatpush1.msra.mxu0 0.0
    %456 = vmatprep.subr.mxu0 0.0
    %457 = vmatpush1.msra.mxu0 0.0
    %458 = vmatprep.subr.mxu0 0.0
    %459 = vmatpush1.msra.mxu0 0.0
    %460 = vmatprep.subr.mxu0 0.0
    %461 = vmatpush1.msra.mxu0 0.0
    %462 = vmatprep.subr.mxu0 0.0
    %463 = vmatpush1.msra.mxu0 0.0
    %464 = vmatprep.subr.mxu0 0.0
    %465 = vmatpush1.msra.mxu0 0.0
    %466 = vmatprep.subr.mxu0 0.0
    %467 = vmatpush1.msra.mxu0 0.0
    %468 = vmatprep.subr.mxu0 0.0
    %469 = vmatpush1.msra.mxu0 0.0
    %470 = vmatprep.subr.mxu0 0.0
    %471 = vmatpush1.msra.mxu0 0.0
    %472 = vmatprep.subr.mxu0 0.0
    %473 = vmatpush1.msra.mxu0 0.0
    %474 = vmatprep.subr.mxu0 0.0
    %475 = vmatpush1.msra.mxu0 0.0
    %476 = vmatprep.subr.mxu0 0.0
    %477 = vmatpush1.msra.mxu0 0.0
    %478 = vmatprep.subr.mxu0 0.0
    %479 = vmatpush1.msra.mxu0 0.0
    %480 = vmatprep.mubr.f32.mxu0 0.0
    %481 = vmatmul.mubr.f32.gmra.mrb[0].mxu0 %v414
    %v482 = vpop.f32.mrb[0].mxu0
    %v483 = vadd.f32 0.0, %v482
    %v484 = vpop.f32.mrb[0].mxu0
    %v485 = vadd.f32 0.0, %v484
    %486 = vdwg.mxu0
    %v488 = vrot.slane %v483, 4
    %v490 = vadd.f32 %v172, %v488
    %v491 = vxor.u32 %v490, 2147483648
    %v492 = vmul.f32 %v491, 1.442695
    %v493 = vpow.pop %v492
    %v494 = vadd.f32 %v493, 1.0
    %v495 = vrcp.pop %v494
    %v496 = vmul.f32 1.0, %v495
    %v497 = vadd.f32 %v485, %v285
    %v499 = vrot.slane %v497, 4
    %v501 = vmul.f32 %v496, %v499
    %v502 = vadd.f32 %v174, %v501
    %v503 = vtanh.pop %v502
    %v505 = vrot.slane %v503, 2
    %v507 = vsub.f32 %v409, %v505
    %v509 = vrot.slane %v507, 6
    %510 = vrot.lane.b32.xlu0 %v509, 64
    %v511 = vpop.permute.xlu0 %510
    %v513 = vmul.f32 %v496, %v511
    %515 = vrot.lane.b32.xlu0 %v513, 64
    %v516 = vpop.permute.xlu0 %515
    %v518 = vadd.f32 %v503, %v516
    %vm519 = vcmask 521220
    %520 = vst.msk [vmem:[#allocation2] sm:$0x30] %vm519, %v518
    %v522 = vrot.slane %v518, 4
    %v523 = vsel %vm199, %v522, 0
    %525 = vmatprep.subr.mxu0 %v183
    %526 = vmatpush1.msra.mxu0 %v182
    %527 = vmatprep.subr.mxu0 %v185
    %528 = vmatpush1.msra.mxu0 %v184
    %529 = vmatprep.subr.mxu0 %v187
    %530 = vmatpush1.msra.mxu0 %v186
    %531 = vmatprep.subr.mxu0 %v189
    %532 = vmatpush1.msra.mxu0 %v188
    %533 = vmatprep.subr.mxu0 %v191
    %534 = vmatpush1.msra.mxu0 %v190
    %535 = vmatprep.subr.mxu0 %v193
    %536 = vmatpush1.msra.mxu0 %v192
    %537 = vmatprep.subr.mxu0 %v195
    %538 = vmatpush1.msra.mxu0 %v194
    %539 = vmatprep.subr.mxu0 %v197
    %540 = vmatpush1.msra.mxu0 %v196
    %541 = vmatprep.subr.mxu0 0.0
    %542 = vmatpush1.msra.mxu0 0.0
    %543 = vmatprep.subr.mxu0 0.0
    %544 = vmatpush1.msra.mxu0 0.0
    %545 = vmatprep.subr.mxu0 0.0
    %546 = vmatpush1.msra.mxu0 0.0
    %547 = vmatprep.subr.mxu0 0.0
    %548 = vmatpush1.msra.mxu0 0.0
    %549 = vmatprep.subr.mxu0 0.0
    %550 = vmatpush1.msra.mxu0 0.0
    %551 = vmatprep.subr.mxu0 0.0
    %552 = vmatpush1.msra.mxu0 0.0
    %553 = vmatprep.subr.mxu0 0.0
    %554 = vmatpush1.msra.mxu0 0.0
    %555 = vmatprep.subr.mxu0 0.0
    %556 = vmatpush1.msra.mxu0 0.0
    %557 = vmatprep.subr.mxu0 0.0
    %558 = vmatpush1.msra.mxu0 0.0
    %559 = vmatprep.subr.mxu0 0.0
    %560 = vmatpush1.msra.mxu0 0.0
    %561 = vmatprep.subr.mxu0 0.0
    %562 = vmatpush1.msra.mxu0 0.0
    %563 = vmatprep.subr.mxu0 0.0
    %564 = vmatpush1.msra.mxu0 0.0
    %565 = vmatprep.subr.mxu0 0.0
    %566 = vmatpush1.msra.mxu0 0.0
    %567 = vmatprep.subr.mxu0 0.0
    %568 = vmatpush1.msra.mxu0 0.0
    %569 = vmatprep.subr.mxu0 0.0
    %570 = vmatpush1.msra.mxu0 0.0
    %571 = vmatprep.subr.mxu0 0.0
    %572 = vmatpush1.msra.mxu0 0.0
    %573 = vmatprep.subr.mxu0 0.0
    %574 = vmatpush1.msra.mxu0 0.0
    %575 = vmatprep.subr.mxu0 0.0
    %576 = vmatpush1.msra.mxu0 0.0
    %577 = vmatprep.subr.mxu0 0.0
    %578 = vmatpush1.msra.mxu0 0.0
    %579 = vmatprep.subr.mxu0 0.0
    %580 = vmatpush1.msra.mxu0 0.0
    %581 = vmatprep.subr.mxu0 0.0
    %582 = vmatpush1.msra.mxu0 0.0
    %583 = vmatprep.subr.mxu0 0.0
    %584 = vmatpush1.msra.mxu0 0.0
    %585 = vmatprep.subr.mxu0 0.0
    %586 = vmatpush1.msra.mxu0 0.0
    %587 = vmatprep.subr.mxu0 0.0
    %588 = vmatpush1.msra.mxu0 0.0
    %589 = vmatprep.mubr.f32.mxu0 0.0
    %590 = vmatmul.mubr.f32.gmra.mrb[0].mxu0 %v523
    %v591 = vpop.f32.mrb[0].mxu0
    %v592 = vadd.f32 0.0, %v591
    %v593 = vpop.f32.mrb[0].mxu0
    %v594 = vadd.f32 0.0, %v593
    %595 = vdwg.mxu0
    %v597 = vrot.slane %v592, 2
    %v599 = vadd.f32 %v172, %v597
    %v600 = vxor.u32 %v599, 2147483648
    %v601 = vmul.f32 %v600, 1.442695
    %v602 = vpow.pop %v601
    %v603 = vadd.f32 %v602, 1.0
    %v604 = vrcp.pop %v603
    %v605 = vmul.f32 1.0, %v604
    %v606 = vadd.f32 %v594, %v285
    %v608 = vrot.slane %v606, 2
    %v610 = vmul.f32 %v605, %v608
    %v611 = vadd.f32 %v174, %v610
    %v612 = vtanh.pop %v611
    %v614 = vrot.slane %v612, 2
    %v616 = vsub.f32 %v518, %v614
    %v618 = vrot.slane %v616, 6
    %619 = vrot.lane.b32.xlu0 %v618, 64
    %v620 = vpop.permute.xlu0 %619
    %v622 = vmul.f32 %v605, %v620
    %624 = vrot.lane.b32.xlu0 %v622, 64
    %v625 = vpop.permute.xlu0 %624
    %v627 = vadd.f32 %v612, %v625
    %vm628 = vcmask 523270
    %629 = vst.msk [vmem:[#allocation2] sm:$0xc0] %vm628, %v627
    %v631 = vrot.slane %v627, 6
    %v632 = vsel %vm199, %v631, 0
    %634 = vmatprep.subr.mxu0 %v183
    %635 = vmatpush1.msra.mxu0 %v182
    %636 = vmatprep.subr.mxu0 %v185
    %637 = vmatpush1.msra.mxu0 %v184
    %638 = vmatprep.subr.mxu0 %v187
    %639 = vmatpush1.msra.mxu0 %v186
    %640 = vmatprep.subr.mxu0 %v189
    %641 = vmatpush1.msra.mxu0 %v188
    %642 = vmatprep.subr.mxu0 %v191
    %643 = vmatpush1.msra.mxu0 %v190
    %644 = vmatprep.subr.mxu0 %v193
    %645 = vmatpush1.msra.mxu0 %v192
    %646 = vmatprep.subr.mxu0 %v195
    %647 = vmatpush1.msra.mxu0 %v194
    %648 = vmatprep.subr.mxu0 %v197
    %649 = vmatpush1.msra.mxu0 %v196
    %650 = vmatprep.subr.mxu0 0.0
    %651 = vmatpush1.msra.mxu0 0.0
    %652 = vmatprep.subr.mxu0 0.0
    %653 = vmatpush1.msra.mxu0 0.0
    %654 = vmatprep.subr.mxu0 0.0
    %655 = vmatpush1.msra.mxu0 0.0
    %656 = vmatprep.subr.mxu0 0.0
    %657 = vmatpush1.msra.mxu0 0.0
    %658 = vmatprep.subr.mxu0 0.0
    %659 = vmatpush1.msra.mxu0 0.0
    %660 = vmatprep.subr.mxu0 0.0
    %661 = vmatpush1.msra.mxu0 0.0
    %662 = vmatprep.subr.mxu0 0.0
    %663 = vmatpush1.msra.mxu0 0.0
    %664 = vmatprep.subr.mxu0 0.0
    %665 = vmatpush1.msra.mxu0 0.0
    %666 = vmatprep.subr.mxu0 0.0
    %667 = vmatpush1.msra.mxu0 0.0
    %668 = vmatprep.subr.mxu0 0.0
    %669 = vmatpush1.msra.mxu0 0.0
    %670 = vmatprep.subr.mxu0 0.0
    %671 = vmatpush1.msra.mxu0 0.0
    %672 = vmatprep.subr.mxu0 0.0
    %673 = vmatpush1.msra.mxu0 0.0
    %674 = vmatprep.subr.mxu0 0.0
    %675 = vmatpush1.msra.mxu0 0.0
    %676 = vmatprep.subr.mxu0 0.0
    %677 = vmatpush1.msra.mxu0 0.0
    %678 = vmatprep.subr.mxu0 0.0
    %679 = vmatpush1.msra.mxu0 0.0
    %680 = vmatprep.subr.mxu0 0.0
    %681 = vmatpush1.msra.mxu0 0.0
    %682 = vmatprep.subr.mxu0 0.0
    %683 = vmatpush1.msra.mxu0 0.0
    %684 = vmatprep.subr.mxu0 0.0
    %685 = vmatpush1.msra.mxu0 0.0
    %686 = vmatprep.subr.mxu0 0.0
    %687 = vmatpush1.msra.mxu0 0.0
    %688 = vmatprep.subr.mxu0 0.0
    %689 = vmatpush1.msra.mxu0 0.0
    %690 = vmatprep.subr.mxu0 0.0
    %691 = vmatpush1.msra.mxu0 0.0
    %692 = vmatprep.subr.mxu0 0.0
    %693 = vmatpush1.msra.mxu0 0.0
    %694 = vmatprep.subr.mxu0 0.0
    %695 = vmatpush1.msra.mxu0 0.0
    %696 = vmatprep.subr.mxu0 0.0
    %697 = vmatpush1.msra.mxu0 0.0
    %698 = vmatprep.mubr.f32.mxu0 0.0
    %699 = vmatmul.mubr.f32.gmra.mrb[0].mxu0 %v632
    %v700 = vpop.f32.mrb[0].mxu0
    %v701 = vadd.f32 0.0, %v700
    %v702 = vpop.f32.mrb[0].mxu0
    %v703 = vadd.f32 0.0, %v702
    %704 = vdwg.mxu0
    %v705 = vadd.f32 %v178, %v701
    %v706 = vxor.u32 %v705, 2147483648
    %v707 = vmul.f32 %v706, 1.442695
    %v708 = vpow.pop %v707
    %v709 = vadd.f32 %v708, 1.0
    %v710 = vrcp.pop %v709
    %v711 = vmul.f32 1.0, %v710
    %v712 = vadd.f32 %v703, %v285
    %v713 = vmul.f32 %v711, %v712
    %v714 = vadd.f32 %v180, %v713
    %v715 = vtanh.pop %v714
    %v717 = vrot.slane %v715, 2
    %v719 = vsub.f32 %v627, %v717
    %v721 = vrot.slane %v719, 6
    %722 = vrot.lane.b32.xlu0 %v721, 64
    %v723 = vpop.permute.xlu0 %722
    %v725 = vmul.f32 %v711, %v723
    %727 = vrot.lane.b32.xlu0 %v725, 64
    %v728 = vpop.permute.xlu0 %727
    %v730 = vadd.f32 %v715, %v728
    %731 = vst.msk [vmem:[#allocation2 + $0x8] sm:$0x3] %vm302, %v730
    %v733 = vsel %vm199, %v730, 0
    %735 = vmatprep.subr.mxu0 %v183
    %736 = vmatpush1.msra.mxu0 %v182
    %737 = vmatprep.subr.mxu0 %v185
    %738 = vmatpush1.msra.mxu0 %v184
    %739 = vmatprep.subr.mxu0 %v187
    %740 = vmatpush1.msra.mxu0 %v186
    %741 = vmatprep.subr.mxu0 %v189
    %742 = vmatpush1.msra.mxu0 %v188
    %743 = vmatprep.subr.mxu0 %v191
    %744 = vmatpush1.msra.mxu0 %v190
    %745 = vmatprep.subr.mxu0 %v193
    %746 = vmatpush1.msra.mxu0 %v192
    %747 = vmatprep.subr.mxu0 %v195
    %748 = vmatpush1.msra.mxu0 %v194
    %749 = vmatprep.subr.mxu0 %v197
    %750 = vmatpush1.msra.mxu0 %v196
    %751 = vmatprep.subr.mxu0 0.0
    %752 = vmatpush1.msra.mxu0 0.0
    %753 = vmatprep.subr.mxu0 0.0
    %754 = vmatpush1.msra.mxu0 0.0
    %755 = vmatprep.subr.mxu0 0.0
    %756 = vmatpush1.msra.mxu0 0.0
    %757 = vmatprep.subr.mxu0 0.0
    %758 = vmatpush1.msra.mxu0 0.0
    %759 = vmatprep.subr.mxu0 0.0
    %760 = vmatpush1.msra.mxu0 0.0
    %761 = vmatprep.subr.mxu0 0.0
    %762 = vmatpush1.msra.mxu0 0.0
    %763 = vmatprep.subr.mxu0 0.0
    %764 = vmatpush1.msra.mxu0 0.0
    %765 = vmatprep.subr.mxu0 0.0
    %766 = vmatpush1.msra.mxu0 0.0
    %767 = vmatprep.subr.mxu0 0.0
    %768 = vmatpush1.msra.mxu0 0.0
    %769 = vmatprep.subr.mxu0 0.0
    %770 = vmatpush1.msra.mxu0 0.0
    %771 = vmatprep.subr.mxu0 0.0
    %772 = vmatpush1.msra.mxu0 0.0
    %773 = vmatprep.subr.mxu0 0.0
    %774 = vmatpush1.msra.mxu0 0.0
    %775 = vmatprep.subr.mxu0 0.0
    %776 = vmatpush1.msra.mxu0 0.0
    %777 = vmatprep.subr.mxu0 0.0
    %778 = vmatpush1.msra.mxu0 0.0
    %779 = vmatprep.subr.mxu0 0.0
    %780 = vmatpush1.msra.mxu0 0.0
    %781 = vmatprep.subr.mxu0 0.0
    %782 = vmatpush1.msra.mxu0 0.0
    %783 = vmatprep.subr.mxu0 0.0
    %784 = vmatpush1.msra.mxu0 0.0
    %785 = vmatprep.subr.mxu0 0.0
    %786 = vmatpush1.msra.mxu0 0.0
    %787 = vmatprep.subr.mxu0 0.0
    %788 = vmatpush1.msra.mxu0 0.0
    %789 = vmatprep.subr.mxu0 0.0
    %790 = vmatpush1.msra.mxu0 0.0
    %791 = vmatprep.subr.mxu0 0.0
    %792 = vmatpush1.msra.mxu0 0.0
    %793 = vmatprep.subr.mxu0 0.0
    %794 = vmatpush1.msra.mxu0 0.0
    %795 = vmatprep.subr.mxu0 0.0
    %796 = vmatpush1.msra.mxu0 0.0
    %797 = vmatprep.subr.mxu0 0.0
    %798 = vmatpush1.msra.mxu0 0.0
    %799 = vmatprep.mubr.f32.mxu0 0.0
    %800 = vmatmul.mubr.f32.gmra.mrb[0].mxu0 %v733
    %v801 = vpop.f32.mrb[0].mxu0
    %v802 = vadd.f32 0.0, %v801
    %v803 = vpop.f32.mrb[0].mxu0
    %v804 = vadd.f32 0.0, %v803
    %805 = vdwg.mxu0
    %v807 = vrot.slane %v802, 6
    %v809 = vadd.f32 %v178, %v807
    %v810 = vxor.u32 %v809, 2147483648
    %v811 = vmul.f32 %v810, 1.442695
    %v812 = vpow.pop %v811
    %v813 = vadd.f32 %v812, 1.0
    %v814 = vrcp.pop %v813
    %v815 = vmul.f32 1.0, %v814
    %v816 = vadd.f32 %v804, %v285
    %v818 = vrot.slane %v816, 6
    %v820 = vmul.f32 %v815, %v818
    %v821 = vadd.f32 %v180, %v820
    %v822 = vtanh.pop %v821
    %v824 = vrot.slane %v822, 2
    %v826 = vsub.f32 %v730, %v824
    %v828 = vrot.slane %v826, 6
    %829 = vrot.lane.b32.xlu0 %v828, 64
    %v830 = vpop.permute.xlu0 %829
    %v832 = vmul.f32 %v815, %v830
    %834 = vrot.lane.b32.xlu0 %v832, 64
    %v835 = vpop.permute.xlu0 %834
    %v837 = vadd.f32 %v822, %v835
    %838 = vst.msk [vmem:[#allocation2 + $0x8] sm:$0xc] %vm410, %v837
    %v840 = vrot.slane %v837, 2
    %v841 = vsel %vm199, %v840, 0
    %843 = vmatprep.subr.mxu0 %v183
    %844 = vmatpush1.msra.mxu0 %v182
    %845 = vmatprep.subr.mxu0 %v185
    %846 = vmatpush1.msra.mxu0 %v184
    %847 = vmatprep.subr.mxu0 %v187
    %848 = vmatpush1.msra.mxu0 %v186
    %849 = vmatprep.subr.mxu0 %v189
    %850 = vmatpush1.msra.mxu0 %v188
    %851 = vmatprep.subr.mxu0 %v191
    %852 = vmatpush1.msra.mxu0 %v190
    %853 = vmatprep.subr.mxu0 %v193
    %854 = vmatpush1.msra.mxu0 %v192
    %855 = vmatprep.subr.mxu0 %v195
    %856 = vmatpush1.msra.mxu0 %v194
    %857 = vmatprep.subr.mxu0 %v197
    %858 = vmatpush1.msra.mxu0 %v196
    %859 = vmatprep.subr.mxu0 0.0
    %860 = vmatpush1.msra.mxu0 0.0
    %861 = vmatprep.subr.mxu0 0.0
    %862 = vmatpush1.msra.mxu0 0.0
    %863 = vmatprep.subr.mxu0 0.0
    %864 = vmatpush1.msra.mxu0 0.0
    %865 = vmatprep.subr.mxu0 0.0
    %866 = vmatpush1.msra.mxu0 0.0
    %867 = vmatprep.subr.mxu0 0.0
    %868 = vmatpush1.msra.mxu0 0.0
    %869 = vmatprep.subr.mxu0 0.0
    %870 = vmatpush1.msra.mxu0 0.0
    %871 = vmatprep.subr.mxu0 0.0
    %872 = vmatpush1.msra.mxu0 0.0
    %873 = vmatprep.subr.mxu0 0.0
    %874 = vmatpush1.msra.mxu0 0.0
    %875 = vmatprep.subr.mxu0 0.0
    %876 = vmatpush1.msra.mxu0 0.0
    %877 = vmatprep.subr.mxu0 0.0
    %878 = vmatpush1.msra.mxu0 0.0
    %879 = vmatprep.subr.mxu0 0.0
    %880 = vmatpush1.msra.mxu0 0.0
    %881 = vmatprep.subr.mxu0 0.0
    %882 = vmatpush1.msra.mxu0 0.0
    %883 = vmatprep.subr.mxu0 0.0
    %884 = vmatpush1.msra.mxu0 0.0
    %885 = vmatprep.subr.mxu0 0.0
    %886 = vmatpush1.msra.mxu0 0.0
    %887 = vmatprep.subr.mxu0 0.0
    %888 = vmatpush1.msra.mxu0 0.0
    %889 = vmatprep.subr.mxu0 0.0
    %890 = vmatpush1.msra.mxu0 0.0
    %891 = vmatprep.subr.mxu0 0.0
    %892 = vmatpush1.msra.mxu0 0.0
    %893 = vmatprep.subr.mxu0 0.0
    %894 = vmatpush1.msra.mxu0 0.0
    %895 = vmatprep.subr.mxu0 0.0
    %896 = vmatpush1.msra.mxu0 0.0
    %897 = vmatprep.subr.mxu0 0.0
    %898 = vmatpush1.msra.mxu0 0.0
    %899 = vmatprep.subr.mxu0 0.0
    %900 = vmatpush1.msra.mxu0 0.0
    %901 = vmatprep.subr.mxu0 0.0
    %902 = vmatpush1.msra.mxu0 0.0
    %903 = vmatprep.subr.mxu0 0.0
    %904 = vmatpush1.msra.mxu0 0.0
    %905 = vmatprep.subr.mxu0 0.0
    %906 = vmatpush1.msra.mxu0 0.0
    %907 = vmatprep.mubr.f32.mxu0 0.0
    %908 = vmatmul.mubr.f32.gmra.mrb[0].mxu0 %v841
    %v909 = vpop.f32.mrb[0].mxu0
    %v910 = vadd.f32 0.0, %v909
    %v911 = vpop.f32.mrb[0].mxu0
    %v912 = vadd.f32 0.0, %v911
    %913 = vdwg.mxu0
    %v915 = vrot.slane %v910, 4
    %v917 = vadd.f32 %v178, %v915
    %v918 = vxor.u32 %v917, 2147483648
    %v919 = vmul.f32 %v918, 1.442695
    %v920 = vpow.pop %v919
    %v921 = vadd.f32 %v920, 1.0
    %v922 = vrcp.pop %v921
    %v923 = vmul.f32 1.0, %v922
    %v924 = vadd.f32 %v912, %v285
    %v926 = vrot.slane %v924, 4
    %v928 = vmul.f32 %v923, %v926
    %v929 = vadd.f32 %v180, %v928
    %v930 = vtanh.pop %v929
    %v932 = vrot.slane %v930, 2
    %v934 = vsub.f32 %v837, %v932
    %v936 = vrot.slane %v934, 6
    %937 = vrot.lane.b32.xlu0 %v936, 64
    %v938 = vpop.permute.xlu0 %937
    %v940 = vmul.f32 %v923, %v938
    %942 = vrot.lane.b32.xlu0 %v940, 64
    %v943 = vpop.permute.xlu0 %942
    %v945 = vadd.f32 %v930, %v943
    %946 = vst.msk [vmem:[#allocation2 + $0x8] sm:$0x30] %vm519, %v945
    %v948 = vrot.slane %v945, 4
    %v949 = vsel %vm199, %v948, 0
    %951 = vmatprep.subr.mxu0 %v183
    %952 = vmatpush1.msra.mxu0 %v182
    %953 = vmatprep.subr.mxu0 %v185
    %954 = vmatpush1.msra.mxu0 %v184
    %955 = vmatprep.subr.mxu0 %v187
    %956 = vmatpush1.msra.mxu0 %v186
    %957 = vmatprep.subr.mxu0 %v189
    %958 = vmatpush1.msra.mxu0 %v188
    %959 = vmatprep.subr.mxu0 %v191
    %960 = vmatpush1.msra.mxu0 %v190
    %961 = vmatprep.subr.mxu0 %v193
    %962 = vmatpush1.msra.mxu0 %v192
    %963 = vmatprep.subr.mxu0 %v195
    %964 = vmatpush1.msra.mxu0 %v194
    %965 = vmatprep.subr.mxu0 %v197
    %966 = vmatpush1.msra.mxu0 %v196
    %967 = vmatprep.subr.mxu0 0.0
    %968 = vmatpush1.msra.mxu0 0.0
    %969 = vmatprep.subr.mxu0 0.0
    %970 = vmatpush1.msra.mxu0 0.0
    %971 = vmatprep.subr.mxu0 0.0
    %972 = vmatpush1.msra.mxu0 0.0
    %973 = vmatprep.subr.mxu0 0.0
    %974 = vmatpush1.msra.mxu0 0.0
    %975 = vmatprep.subr.mxu0 0.0
    %976 = vmatpush1.msra.mxu0 0.0
    %977 = vmatprep.subr.mxu0 0.0
    %978 = vmatpush1.msra.mxu0 0.0
    %979 = vmatprep.subr.mxu0 0.0
    %980 = vmatpush1.msra.mxu0 0.0
    %981 = vmatprep.subr.mxu0 0.0
    %982 = vmatpush1.msra.mxu0 0.0
    %983 = vmatprep.subr.mxu0 0.0
    %984 = vmatpush1.msra.mxu0 0.0
    %985 = vmatprep.subr.mxu0 0.0
    %986 = vmatpush1.msra.mxu0 0.0
    %987 = vmatprep.subr.mxu0 0.0
    %988 = vmatpush1.msra.mxu0 0.0
    %989 = vmatprep.subr.mxu0 0.0
    %990 = vmatpush1.msra.mxu0 0.0
    %991 = vmatprep.subr.mxu0 0.0
    %992 = vmatpush1.msra.mxu0 0.0
    %993 = vmatprep.subr.mxu0 0.0
    %994 = vmatpush1.msra.mxu0 0.0
    %995 = vmatprep.subr.mxu0 0.0
    %996 = vmatpush1.msra.mxu0 0.0
    %997 = vmatprep.subr.mxu0 0.0
    %998 = vmatpush1.msra.mxu0 0.0
    %999 = vmatprep.subr.mxu0 0.0
    %1000 = vmatpush1.msra.mxu0 0.0
    %1001 = vmatprep.subr.mxu0 0.0
    %1002 = vmatpush1.msra.mxu0 0.0
    %1003 = vmatprep.subr.mxu0 0.0
    %1004 = vmatpush1.msra.mxu0 0.0
    %1005 = vmatprep.subr.mxu0 0.0
    %1006 = vmatpush1.msra.mxu0 0.0
    %1007 = vmatprep.subr.mxu0 0.0
    %1008 = vmatpush1.msra.mxu0 0.0
    %1009 = vmatprep.subr.mxu0 0.0
    %1010 = vmatpush1.msra.mxu0 0.0
    %1011 = vmatprep.subr.mxu0 0.0
    %1012 = vmatpush1.msra.mxu0 0.0
    %1013 = vmatprep.subr.mxu0 0.0
    %1014 = vmatpush1.msra.mxu0 0.0
    %1015 = vmatprep.mubr.f32.mxu0 0.0
    %1016 = vmatmul.mubr.f32.gmra.mrb[0].mxu0 %v949
    %v1017 = vpop.f32.mrb[0].mxu0
    %v1018 = vadd.f32 0.0, %v1017
    %v1019 = vpop.f32.mrb[0].mxu0
    %v1020 = vadd.f32 0.0, %v1019
    %1021 = vdwg.mxu0
    %v1023 = vrot.slane %v1018, 2
    %v1025 = vadd.f32 %v178, %v1023
    %v1026 = vxor.u32 %v1025, 2147483648
    %v1027 = vmul.f32 %v1026, 1.442695
    %v1028 = vpow.pop %v1027
    %v1029 = vadd.f32 %v1028, 1.0
    %v1030 = vrcp.pop %v1029
    %v1031 = vmul.f32 1.0, %v1030
    %v1032 = vadd.f32 %v1020, %v285
    %v1034 = vrot.slane %v1032, 2
    %v1036 = vmul.f32 %v1031, %v1034
    %v1037 = vadd.f32 %v180, %v1036
    %v1038 = vtanh.pop %v1037
    %v1040 = vrot.slane %v1038, 2
    %v1042 = vsub.f32 %v945, %v1040
    %v1044 = vrot.slane %v1042, 6
    %1045 = vrot.lane.b32.xlu0 %v1044, 64
    %v1046 = vpop.permute.xlu0 %1045
    %v1048 = vmul.f32 %v1031, %v1046
    %1050 = vrot.lane.b32.xlu0 %v1048, 64
    %v1051 = vpop.permute.xlu0 %1050
    %v1053 = vadd.f32 %v1038, %v1051
    %1054 = vst.msk [vmem:[#allocation2 + $0x8] sm:$0xc0] %vm628, %v1053
    %v1055 = vld [vmem:[#allocation2] sm:$0xff]
    %v1056 = vld [vmem:[#allocation2 + $0x8] sm:$0xff]
    %v1057 = vld [vmem:[#allocation5] sm:$0xff]
    %v1058 = vld [vmem:[#allocation5 + $0x8] sm:$0xff]
    %v1059 = vld [vmem:[#allocation5 + $0x10] sm:$0xff]
    %v1060 = vld [vmem:[#allocation5 + $0x18] sm:$0xff]
    %v1061 = vld [vmem:[#allocation5 + $0x20] sm:$0xff]
    %v1062 = vld [vmem:[#allocation5 + $0x28] sm:$0xff]
    %v1063 = vld [vmem:[#allocation5 + $0x30] sm:$0xff]
    %v1064 = vld [vmem:[#allocation5 + $0x38] sm:$0xff]
    %v1065 = vld [vmem:[#allocation5 + $0x40] sm:$0xff]
    %v1066 = vld [vmem:[#allocation5 + $0x48] sm:$0xff]
    %v1067 = vld [vmem:[#allocation5 + $0x50] sm:$0xff]
    %v1068 = vld [vmem:[#allocation5 + $0x58] sm:$0xff]
    %v1069 = vld [vmem:[#allocation5 + $0x60] sm:$0xff]
    %v1070 = vld [vmem:[#allocation5 + $0x68] sm:$0xff]
    %v1071 = vld [vmem:[#allocation5 + $0x70] sm:$0xff]
    %v1072 = vld [vmem:[#allocation5 + $0x78] sm:$0xff]
    %v1073 = vld [vmem:[%s6] sm:$0x3]
    %v1075 = vlaneseq
    %v1076 = vshrl.u32 %v1075, 7
    %v1077 = vsub.s32 0, %v1076
    %v1078 = vrot.slane %v1073, %v1077
    %v1079 = vlaneseq
    %v1080 = vshrl.u32 %v1079, 7
    %v1081 = vsub.s32 1, %v1080
    %v1082 = vrot.slane %v1073, %v1081
    %v1086 = vsel %vm199, %v1055, 0
    %v1089 = vsel %vm199, %v1056, 0
    %1091 = vmatprep.subr.mxu0 %v1058
    %1092 = vmatpush1.msra.mxu0 %v1057
    %1093 = vmatprep.subr.mxu0 %v1060
    %1094 = vmatpush1.msra.mxu0 %v1059
    %1095 = vmatprep.subr.mxu0 %v1062
    %1096 = vmatpush1.msra.mxu0 %v1061
    %1097 = vmatprep.subr.mxu0 %v1064
    %1098 = vmatpush1.msra.mxu0 %v1063
    %1099 = vmatprep.subr.mxu0 %v1066
    %1100 = vmatpush1.msra.mxu0 %v1065
    %1101 = vmatprep.subr.mxu0 %v1068
    %1102 = vmatpush1.msra.mxu0 %v1067
    %1103 = vmatprep.subr.mxu0 %v1070
    %1104 = vmatpush1.msra.mxu0 %v1069
    %1105 = vmatprep.subr.mxu0 %v1072
    %1106 = vmatpush1.msra.mxu0 %v1071
    %1107 = vmatprep.subr.mxu0 0.0
    %1108 = vmatpush1.msra.mxu0 0.0
    %1109 = vmatprep.subr.mxu0 0.0
    %1110 = vmatpush1.msra.mxu0 0.0
    %1111 = vmatprep.subr.mxu0 0.0
    %1112 = vmatpush1.msra.mxu0 0.0
    %1113 = vmatprep.subr.mxu0 0.0
    %1114 = vmatpush1.msra.mxu0 0.0
    %1115 = vmatprep.subr.mxu0 0.0
    %1116 = vmatpush1.msra.mxu0 0.0
    %1117 = vmatprep.subr.mxu0 0.0
    %1118 = vmatpush1.msra.mxu0 0.0
    %1119 = vmatprep.subr.mxu0 0.0
    %1120 = vmatpush1.msra.mxu0 0.0
    %1121 = vmatprep.subr.mxu0 0.0
    %1122 = vmatpush1.msra.mxu0 0.0
    %1123 = vmatprep.subr.mxu0 0.0
    %1124 = vmatpush1.msra.mxu0 0.0
    %1125 = vmatprep.subr.mxu0 0.0
    %1126 = vmatpush1.msra.mxu0 0.0
    %1127 = vmatprep.subr.mxu0 0.0
    %1128 = vmatpush1.msra.mxu0 0.0
    %1129 = vmatprep.subr.mxu0 0.0
    %1130 = vmatpush1.msra.mxu0 0.0
    %1131 = vmatprep.subr.mxu0 0.0
    %1132 = vmatpush1.msra.mxu0 0.0
    %1133 = vmatprep.subr.mxu0 0.0
    %1134 = vmatpush1.msra.mxu0 0.0
    %1135 = vmatprep.subr.mxu0 0.0
    %1136 = vmatpush1.msra.mxu0 0.0
    %1137 = vmatprep.subr.mxu0 0.0
    %1138 = vmatpush1.msra.mxu0 0.0
    %1139 = vmatprep.subr.mxu0 0.0
    %1140 = vmatpush1.msra.mxu0 0.0
    %1141 = vmatprep.subr.mxu0 0.0
    %1142 = vmatpush1.msra.mxu0 0.0
    %1143 = vmatprep.subr.mxu0 0.0
    %1144 = vmatpush1.msra.mxu0 0.0
    %1145 = vmatprep.subr.mxu0 0.0
    %1146 = vmatpush1.msra.mxu0 0.0
    %1147 = vmatprep.subr.mxu0 0.0
    %1148 = vmatpush1.msra.mxu0 0.0
    %1149 = vmatprep.subr.mxu0 0.0
    %1150 = vmatpush1.msra.mxu0 0.0
    %1151 = vmatprep.subr.mxu0 0.0
    %1152 = vmatpush1.msra.mxu0 0.0
    %1153 = vmatprep.subr.mxu0 0.0
    %1154 = vmatpush1.msra.mxu0 0.0
    %1155 = vmatprep.mubr.f32.mxu0 0.0
    %1156 = vmatmul.mubr.f32.gmra.mrb[0].mxu0 %v1086
    %v1157 = vpop.f32.mrb[0].mxu0
    %v1158 = vadd.f32 %v1078, %v1157
    %v1159 = vpop.f32.mrb[0].mxu0
    %v1160 = vadd.f32 %v1082, %v1159
    %1161 = vmatprep.mubr.f32.mxu0 0.0
    %1162 = vmatmul.mubr.f32.gmra.mrb[0].mxu0 %v1089
    %v1163 = vpop.f32.mrb[0].mxu0
    %v1164 = vadd.f32 %v1078, %v1163
    %v1165 = vpop.f32.mrb[0].mxu0
    %v1166 = vadd.f32 %v1082, %v1165
    %1167 = vdwg.mxu0
    %v1168 = vld [vmem:[#allocation7] sm:$0xff]
    %v1169 = vld [vmem:[#allocation7 + $0x8] sm:$0xff]
    %v1170 = vld [vmem:[#allocation7 + $0x10] sm:$0xff]
    %v1171 = vld [vmem:[#allocation7 + $0x18] sm:$0xff]
    %v1172 = vld [vmem:[#allocation7 + $0x20] sm:$0xff]
    %v1173 = vld [vmem:[#allocation7 + $0x28] sm:$0xff]
    %v1174 = vld [vmem:[#allocation7 + $0x30] sm:$0xff]
    %v1175 = vld [vmem:[#allocation7 + $0x38] sm:$0xff]
    %v1176 = vld [vmem:[#allocation7 + $0x40] sm:$0xff]
    %v1177 = vld [vmem:[#allocation7 + $0x48] sm:$0xff]
    %v1178 = vld [vmem:[#allocation7 + $0x50] sm:$0xff]
    %v1179 = vld [vmem:[#allocation7 + $0x58] sm:$0xff]
    %v1180 = vld [vmem:[#allocation7 + $0x60] sm:$0xff]
    %v1181 = vld [vmem:[#allocation7 + $0x68] sm:$0xff]
    %v1182 = vld [vmem:[#allocation7 + $0x70] sm:$0xff]
    %v1183 = vld [vmem:[#allocation7 + $0x78] sm:$0xff]
    %v1184 = vld [vmem:[%s8] sm:$0x1]
    %1185 = vmatprep.subr.mxu0 %v1169
    %1186 = vmatpush1.msra.mxu0 %v1168
    %1187 = vmatprep.subr.mxu0 %v1171
    %1188 = vmatpush1.msra.mxu0 %v1170
    %1189 = vmatprep.subr.mxu0 %v1173
    %1190 = vmatpush1.msra.mxu0 %v1172
    %1191 = vmatprep.subr.mxu0 %v1175
    %1192 = vmatpush1.msra.mxu0 %v1174
    %1193 = vmatprep.subr.mxu0 %v1177
    %1194 = vmatpush1.msra.mxu0 %v1176
    %1195 = vmatprep.subr.mxu0 %v1179
    %1196 = vmatpush1.msra.mxu0 %v1178
    %1197 = vmatprep.subr.mxu0 %v1181
    %1198 = vmatpush1.msra.mxu0 %v1180
    %1199 = vmatprep.subr.mxu0 %v1183
    %1200 = vmatpush1.msra.mxu0 %v1182
    %1201 = vmatprep.subr.mxu0 0.0
    %1202 = vmatpush1.msra.mxu0 0.0
    %1203 = vmatprep.subr.mxu0 0.0
    %1204 = vmatpush1.msra.mxu0 0.0
    %1205 = vmatprep.subr.mxu0 0.0
    %1206 = vmatpush1.msra.mxu0 0.0
    %1207 = vmatprep.subr.mxu0 0.0
    %1208 = vmatpush1.msra.mxu0 0.0
    %1209 = vmatprep.subr.mxu0 0.0
    %1210 = vmatpush1.msra.mxu0 0.0
    %1211 = vmatprep.subr.mxu0 0.0
    %1212 = vmatpush1.msra.mxu0 0.0
    %1213 = vmatprep.subr.mxu0 0.0
    %1214 = vmatpush1.msra.mxu0 0.0
    %1215 = vmatprep.subr.mxu0 0.0
    %1216 = vmatpush1.msra.mxu0 0.0
    %1217 = vmatprep.subr.mxu0 0.0
    %1218 = vmatpush1.msra.mxu0 0.0
    %1219 = vmatprep.subr.mxu0 0.0
    %1220 = vmatpush1.msra.mxu0 0.0
    %1221 = vmatprep.subr.mxu0 0.0
    %1222 = vmatpush1.msra.mxu0 0.0
    %1223 = vmatprep.subr.mxu0 0.0
    %1224 = vmatpush1.msra.mxu0 0.0
    %1225 = vmatprep.subr.mxu0 0.0
    %1226 = vmatpush1.msra.mxu0 0.0
    %1227 = vmatprep.subr.mxu0 0.0
    %1228 = vmatpush1.msra.mxu0 0.0
    %1229 = vmatprep.subr.mxu0 0.0
    %1230 = vmatpush1.msra.mxu0 0.0
    %1231 = vmatprep.subr.mxu0 0.0
    %1232 = vmatpush1.msra.mxu0 0.0
    %1233 = vmatprep.subr.mxu0 0.0
    %1234 = vmatpush1.msra.mxu0 0.0
    %1235 = vmatprep.subr.mxu0 0.0
    %1236 = vmatpush1.msra.mxu0 0.0
    %1237 = vmatprep.subr.mxu0 0.0
    %1238 = vmatpush1.msra.mxu0 0.0
    %1239 = vmatprep.subr.mxu0 0.0
    %1240 = vmatpush1.msra.mxu0 0.0
    %1241 = vmatprep.subr.mxu0 0.0
    %1242 = vmatpush1.msra.mxu0 0.0
    %1243 = vmatprep.subr.mxu0 0.0
    %1244 = vmatpush1.msra.mxu0 0.0
    %1245 = vmatprep.subr.mxu0 0.0
    %1246 = vmatpush1.msra.mxu0 0.0
    %1247 = vmatprep.subr.mxu0 0.0
    %1248 = vmatpush1.msra.mxu0 0.0
    %1249 = vmatprep.mubr.f32.mxu0 0.0
    %1250 = vmatmul.mubr.f32.gmra.mrb[0].mxu0 %v201
    %v1251 = vpop.f32.mrb[0].mxu0
    %v1252 = vadd.f32 0.0, %v1251
    %v1253 = vpop.f32.mrb[0].mxu0
    %v1254 = vadd.f32 0.0, %v1253
    %1255 = vdwg.mxu0
    %v1256 = vadd.f32 %v1158, %v1252
    %v1257 = vxor.u32 %v1256, 2147483648
    %v1258 = vmul.f32 %v1257, 1.442695
    %v1259 = vpow.pop %v1258
    %v1260 = vadd.f32 %v1259, 1.0
    %v1261 = vrcp.pop %v1260
    %v1262 = vmul.f32 1.0, %v1261
    %v1264 = vlaneseq
    %v1265 = vshrl.u32 %v1264, 7
    %v1266 = vsub.s32 0, %v1265
    %v1267 = vrot.slane %v1184, %v1266
    %v1269 = vadd.f32 %v1254, %v1267
    %v1270 = vmul.f32 %v1262, %v1269
    %v1271 = vadd.f32 %v1160, %v1270
    %v1272 = vtanh.pop %v1271
    %v1273 = vsub.f32 0.0, %v1272
    %1275 = vrot.lane.b32.xlu0 %v1273, 64
    %v1276 = vpop.permute.xlu0 %1275
    %v1278 = vmul.f32 %v1262, %v1276
    %1280 = vrot.lane.b32.xlu0 %v1278, 64
    %v1281 = vpop.permute.xlu0 %1280
    %v1283 = vadd.f32 %v1272, %v1281
    %1284 = vst.msk [vmem:[%s9] sm:$0x3] %vm302, %v1283
    %v1286 = vsel %vm199, %v1283, 0
    %1288 = vmatprep.subr.mxu0 %v1169
    %1289 = vmatpush1.msra.mxu0 %v1168
    %1290 = vmatprep.subr.mxu0 %v1171
    %1291 = vmatpush1.msra.mxu0 %v1170
    %1292 = vmatprep.subr.mxu0 %v1173
    %1293 = vmatpush1.msra.mxu0 %v1172
    %1294 = vmatprep.subr.mxu0 %v1175
    %1295 = vmatpush1.msra.mxu0 %v1174
    %1296 = vmatprep.subr.mxu0 %v1177
    %1297 = vmatpush1.msra.mxu0 %v1176
    %1298 = vmatprep.subr.mxu0 %v1179
    %1299 = vmatpush1.msra.mxu0 %v1178
    %1300 = vmatprep.subr.mxu0 %v1181
    %1301 = vmatpush1.msra.mxu0 %v1180
    %1302 = vmatprep.subr.mxu0 %v1183
    %1303 = vmatpush1.msra.mxu0 %v1182
    %1304 = vmatprep.subr.mxu0 0.0
    %1305 = vmatpush1.msra.mxu0 0.0
    %1306 = vmatprep.subr.mxu0 0.0
    %1307 = vmatpush1.msra.mxu0 0.0
    %1308 = vmatprep.subr.mxu0 0.0
    %1309 = vmatpush1.msra.mxu0 0.0
    %1310 = vmatprep.subr.mxu0 0.0
    %1311 = vmatpush1.msra.mxu0 0.0
    %1312 = vmatprep.subr.mxu0 0.0
    %1313 = vmatpush1.msra.mxu0 0.0
    %1314 = vmatprep.subr.mxu0 0.0
    %1315 = vmatpush1.msra.mxu0 0.0
    %1316 = vmatprep.subr.mxu0 0.0
    %1317 = vmatpush1.msra.mxu0 0.0
    %1318 = vmatprep.subr.mxu0 0.0
    %1319 = vmatpush1.msra.mxu0 0.0
    %1320 = vmatprep.subr.mxu0 0.0
    %1321 = vmatpush1.msra.mxu0 0.0
    %1322 = vmatprep.subr.mxu0 0.0
    %1323 = vmatpush1.msra.mxu0 0.0
    %1324 = vmatprep.subr.mxu0 0.0
    %1325 = vmatpush1.msra.mxu0 0.0
    %1326 = vmatprep.subr.mxu0 0.0
    %1327 = vmatpush1.msra.mxu0 0.0
    %1328 = vmatprep.subr.mxu0 0.0
    %1329 = vmatpush1.msra.mxu0 0.0
    %1330 = vmatprep.subr.mxu0 0.0
    %1331 = vmatpush1.msra.mxu0 0.0
    %1332 = vmatprep.subr.mxu0 0.0
    %1333 = vmatpush1.msra.mxu0 0.0
    %1334 = vmatprep.subr.mxu0 0.0
    %1335 = vmatpush1.msra.mxu0 0.0
    %1336 = vmatprep.subr.mxu0 0.0
    %1337 = vmatpush1.msra.mxu0 0.0
    %1338 = vmatprep.subr.mxu0 0.0
    %1339 = vmatpush1.msra.mxu0 0.0
    %1340 = vmatprep.subr.mxu0 0.0
    %1341 = vmatpush1.msra.mxu0 0.0
    %1342 = vmatprep.subr.mxu0 0.0
    %1343 = vmatpush1.msra.mxu0 0.0
    %1344 = vmatprep.subr.mxu0 0.0
    %1345 = vmatpush1.msra.mxu0 0.0
    %1346 = vmatprep.subr.mxu0 0.0
    %1347 = vmatpush1.msra.mxu0 0.0
    %1348 = vmatprep.subr.mxu0 0.0
    %1349 = vmatpush1.msra.mxu0 0.0
    %1350 = vmatprep.subr.mxu0 0.0
    %1351 = vmatpush1.msra.mxu0 0.0
    %1352 = vmatprep.mubr.f32.mxu0 0.0
    %1353 = vmatmul.mubr.f32.gmra.mrb[0].mxu0 %v1286
    %v1354 = vpop.f32.mrb[0].mxu0
    %v1355 = vadd.f32 0.0, %v1354
    %v1356 = vpop.f32.mrb[0].mxu0
    %v1357 = vadd.f32 0.0, %v1356
    %1358 = vdwg.mxu0
    %v1360 = vrot.slane %v1355, 6
    %v1362 = vadd.f32 %v1158, %v1360
    %v1363 = vxor.u32 %v1362, 2147483648
    %v1364 = vmul.f32 %v1363, 1.442695
    %v1365 = vpow.pop %v1364
    %v1366 = vadd.f32 %v1365, 1.0
    %v1367 = vrcp.pop %v1366
    %v1368 = vmul.f32 1.0, %v1367
    %v1369 = vadd.f32 %v1357, %v1267
    %v1371 = vrot.slane %v1369, 6
    %v1373 = vmul.f32 %v1368, %v1371
    %v1374 = vadd.f32 %v1160, %v1373
    %v1375 = vtanh.pop %v1374
    %v1377 = vrot.slane %v1375, 2
    %v1379 = vsub.f32 %v1283, %v1377
    %v1381 = vrot.slane %v1379, 6
    %1382 = vrot.lane.b32.xlu0 %v1381, 64
    %v1383 = vpop.permute.xlu0 %1382
    %v1385 = vmul.f32 %v1368, %v1383
    %1387 = vrot.lane.b32.xlu0 %v1385, 64
    %v1388 = vpop.permute.xlu0 %1387
    %v1390 = vadd.f32 %v1375, %v1388
    %1391 = vst.msk [vmem:[%s9] sm:$0xc] %vm410, %v1390
    %v1393 = vrot.slane %v1390, 2
    %v1394 = vsel %vm199, %v1393, 0
    %1396 = vmatprep.subr.mxu0 %v1169
    %1397 = vmatpush1.msra.mxu0 %v1168
    %1398 = vmatprep.subr.mxu0 %v1171
    %1399 = vmatpush1.msra.mxu0 %v1170
    %1400 = vmatprep.subr.mxu0 %v1173
    %1401 = vmatpush1.msra.mxu0 %v1172
    %1402 = vmatprep.subr.mxu0 %v1175
    %1403 = vmatpush1.msra.mxu0 %v1174
    %1404 = vmatprep.subr.mxu0 %v1177
    %1405 = vmatpush1.msra.mxu0 %v1176
    %1406 = vmatprep.subr.mxu0 %v1179
    %1407 = vmatpush1.msra.mxu0 %v1178
    %1408 = vmatprep.subr.mxu0 %v1181
    %1409 = vmatpush1.msra.mxu0 %v1180
    %1410 = vmatprep.subr.mxu0 %v1183
    %1411 = vmatpush1.msra.mxu0 %v1182
    %1412 = vmatprep.subr.mxu0 0.0
    %1413 = vmatpush1.msra.mxu0 0.0
    %1414 = vmatprep.subr.mxu0 0.0
    %1415 = vmatpush1.msra.mxu0 0.0
    %1416 = vmatprep.subr.mxu0 0.0
    %1417 = vmatpush1.msra.mxu0 0.0
    %1418 = vmatprep.subr.mxu0 0.0
    %1419 = vmatpush1.msra.mxu0 0.0
    %1420 = vmatprep.subr.mxu0 0.0
    %1421 = vmatpush1.msra.mxu0 0.0
    %1422 = vmatprep.subr.mxu0 0.0
    %1423 = vmatpush1.msra.mxu0 0.0
    %1424 = vmatprep.subr.mxu0 0.0
    %1425 = vmatpush1.msra.mxu0 0.0
    %1426 = vmatprep.subr.mxu0 0.0
    %1427 = vmatpush1.msra.mxu0 0.0
    %1428 = vmatprep.subr.mxu0 0.0
    %1429 = vmatpush1.msra.mxu0 0.0
    %1430 = vmatprep.subr.mxu0 0.0
    %1431 = vmatpush1.msra.mxu0 0.0
    %1432 = vmatprep.subr.mxu0 0.0
    %1433 = vmatpush1.msra.mxu0 0.0
    %1434 = vmatprep.subr.mxu0 0.0
    %1435 = vmatpush1.msra.mxu0 0.0
    %1436 = vmatprep.subr.mxu0 0.0
    %1437 = vmatpush1.msra.mxu0 0.0
    %1438 = vmatprep.subr.mxu0 0.0
    %1439 = vmatpush1.msra.mxu0 0.0
    %1440 = vmatprep.subr.mxu0 0.0
    %1441 = vmatpush1.msra.mxu0 0.0
    %1442 = vmatprep.subr.mxu0 0.0
    %1443 = vmatpush1.msra.mxu0 0.0
    %1444 = vmatprep.subr.mxu0 0.0
    %1445 = vmatpush1.msra.mxu0 0.0
    %1446 = vmatprep.subr.mxu0 0.0
    %1447 = vmatpush1.msra.mxu0 0.0
    %1448 = vmatprep.subr.mxu0 0.0
    %1449 = vmatpush1.msra.mxu0 0.0
    %1450 = vmatprep.subr.mxu0 0.0
    %1451 = vmatpush1.msra.mxu0 0.0
    %1452 = vmatprep.subr.mxu0 0.0
    %1453 = vmatpush1.msra.mxu0 0.0
    %1454 = vmatprep.subr.mxu0 0.0
    %1455 = vmatpush1.msra.mxu0 0.0
    %1456 = vmatprep.subr.mxu0 0.0
    %1457 = vmatpush1.msra.mxu0 0.0
    %1458 = vmatprep.subr.mxu0 0.0
    %1459 = vmatpush1.msra.mxu0 0.0
    %1460 = vmatprep.mubr.f32.mxu0 0.0
    %1461 = vmatmul.mubr.f32.gmra.mrb[0].mxu0 %v1394
    %v1462 = vpop.f32.mrb[0].mxu0
    %v1463 = vadd.f32 0.0, %v1462
    %v1464 = vpop.f32.mrb[0].mxu0
    %v1465 = vadd.f32 0.0, %v1464
    %1466 = vdwg.mxu0
    %v1468 = vrot.slane %v1463, 4
    %v1470 = vadd.f32 %v1158, %v1468
    %v1471 = vxor.u32 %v1470, 2147483648
    %v1472 = vmul.f32 %v1471, 1.442695
    %v1473 = vpow.pop %v1472
    %v1474 = vadd.f32 %v1473, 1.0
    %v1475 = vrcp.pop %v1474
    %v1476 = vmul.f32 1.0, %v1475
    %v1477 = vadd.f32 %v1465, %v1267
    %v1479 = vrot.slane %v1477, 4
    %v1481 = vmul.f32 %v1476, %v1479
    %v1482 = vadd.f32 %v1160, %v1481
    %v1483 = vtanh.pop %v1482
    %v1485 = vrot.slane %v1483, 2
    %v1487 = vsub.f32 %v1390, %v1485
    %v1489 = vrot.slane %v1487, 6
    %1490 = vrot.lane.b32.xlu0 %v1489, 64
    %v1491 = vpop.permute.xlu0 %1490
    %v1493 = vmul.f32 %v1476, %v1491
    %1495 = vrot.lane.b32.xlu0 %v1493, 64
    %v1496 = vpop.permute.xlu0 %1495
    %v1498 = vadd.f32 %v1483, %v1496
    %1499 = vst.msk [vmem:[%s9] sm:$0x30] %vm519, %v1498
    %v1501 = vrot.slane %v1498, 4
    %v1502 = vsel %vm199, %v1501, 0
    %1504 = vmatprep.subr.mxu0 %v1169
    %1505 = vmatpush1.msra.mxu0 %v1168
    %1506 = vmatprep.subr.mxu0 %v1171
    %1507 = vmatpush1.msra.mxu0 %v1170
    %1508 = vmatprep.subr.mxu0 %v1173
    %1509 = vmatpush1.msra.mxu0 %v1172
    %1510 = vmatprep.subr.mxu0 %v1175
    %1511 = vmatpush1.msra.mxu0 %v1174
    %1512 = vmatprep.subr.mxu0 %v1177
    %1513 = vmatpush1.msra.mxu0 %v1176
    %1514 = vmatprep.subr.mxu0 %v1179
    %1515 = vmatpush1.msra.mxu0 %v1178
    %1516 = vmatprep.subr.mxu0 %v1181
    %1517 = vmatpush1.msra.mxu0 %v1180
    %1518 = vmatprep.subr.mxu0 %v1183
    %1519 = vmatpush1.msra.mxu0 %v1182
    %1520 = vmatprep.subr.mxu0 0.0
    %1521 = vmatpush1.msra.mxu0 0.0
    %1522 = vmatprep.subr.mxu0 0.0
    %1523 = vmatpush1.msra.mxu0 0.0
    %1524 = vmatprep.subr.mxu0 0.0
    %1525 = vmatpush1.msra.mxu0 0.0
    %1526 = vmatprep.subr.mxu0 0.0
    %1527 = vmatpush1.msra.mxu0 0.0
    %1528 = vmatprep.subr.mxu0 0.0
    %1529 = vmatpush1.msra.mxu0 0.0
    %1530 = vmatprep.subr.mxu0 0.0
    %1531 = vmatpush1.msra.mxu0 0.0
    %1532 = vmatprep.subr.mxu0 0.0
    %1533 = vmatpush1.msra.mxu0 0.0
    %1534 = vmatprep.subr.mxu0 0.0
    %1535 = vmatpush1.msra.mxu0 0.0
    %1536 = vmatprep.subr.mxu0 0.0
    %1537 = vmatpush1.msra.mxu0 0.0
    %1538 = vmatprep.subr.mxu0 0.0
    %1539 = vmatpush1.msra.mxu0 0.0
    %1540 = vmatprep.subr.mxu0 0.0
    %1541 = vmatpush1.msra.mxu0 0.0
    %1542 = vmatprep.subr.mxu0 0.0
    %1543 = vmatpush1.msra.mxu0 0.0
    %1544 = vmatprep.subr.mxu0 0.0
    %1545 = vmatpush1.msra.mxu0 0.0
    %1546 = vmatprep.subr.mxu0 0.0
    %1547 = vmatpush1.msra.mxu0 0.0
    %1548 = vmatprep.subr.mxu0 0.0
    %1549 = vmatpush1.msra.mxu0 0.0
    %1550 = vmatprep.subr.mxu0 0.0
    %1551 = vmatpush1.msra.mxu0 0.0
    %1552 = vmatprep.subr.mxu0 0.0
    %1553 = vmatpush1.msra.mxu0 0.0
    %1554 = vmatprep.subr.mxu0 0.0
    %1555 = vmatpush1.msra.mxu0 0.0
    %1556 = vmatprep.subr.mxu0 0.0
    %1557 = vmatpush1.msra.mxu0 0.0
    %1558 = vmatprep.subr.mxu0 0.0
    %1559 = vmatpush1.msra.mxu0 0.0
    %1560 = vmatprep.subr.mxu0 0.0
    %1561 = vmatpush1.msra.mxu0 0.0
    %1562 = vmatprep.subr.mxu0 0.0
    %1563 = vmatpush1.msra.mxu0 0.0
    %1564 = vmatprep.subr.mxu0 0.0
    %1565 = vmatpush1.msra.mxu0 0.0
    %1566 = vmatprep.subr.mxu0 0.0
    %1567 = vmatpush1.msra.mxu0 0.0
    %1568 = vmatprep.mubr.f32.mxu0 0.0
    %1569 = vmatmul.mubr.f32.gmra.mrb[0].mxu0 %v1502
    %v1570 = vpop.f32.mrb[0].mxu0
    %v1571 = vadd.f32 0.0, %v1570
    %v1572 = vpop.f32.mrb[0].mxu0
    %v1573 = vadd.f32 0.0, %v1572
    %1574 = vdwg.mxu0
    %v1576 = vrot.slane %v1571, 2
    %v1578 = vadd.f32 %v1158, %v1576
    %v1579 = vxor.u32 %v1578, 2147483648
    %v1580 = vmul.f32 %v1579, 1.442695
    %v1581 = vpow.pop %v1580
    %v1582 = vadd.f32 %v1581, 1.0
    %v1583 = vrcp.pop %v1582
    %v1584 = vmul.f32 1.0, %v1583
    %v1585 = vadd.f32 %v1573, %v1267
    %v1587 = vrot.slane %v1585, 2
    %v1589 = vmul.f32 %v1584, %v1587
    %v1590 = vadd.f32 %v1160, %v1589
    %v1591 = vtanh.pop %v1590
    %v1593 = vrot.slane %v1591, 2
    %v1595 = vsub.f32 %v1498, %v1593
    %v1597 = vrot.slane %v1595, 6
    %1598 = vrot.lane.b32.xlu0 %v1597, 64
    %v1599 = vpop.permute.xlu0 %1598
    %v1601 = vmul.f32 %v1584, %v1599
    %1603 = vrot.lane.b32.xlu0 %v1601, 64
    %v1604 = vpop.permute.xlu0 %1603
    %v1606 = vadd.f32 %v1591, %v1604
    %1607 = vst.msk [vmem:[%s9] sm:$0xc0] %vm628, %v1606
    %v1609 = vrot.slane %v1606, 6
    %v1610 = vsel %vm199, %v1609, 0
    %1612 = vmatprep.subr.mxu0 %v1169
    %1613 = vmatpush1.msra.mxu0 %v1168
    %1614 = vmatprep.subr.mxu0 %v1171
    %1615 = vmatpush1.msra.mxu0 %v1170
    %1616 = vmatprep.subr.mxu0 %v1173
    %1617 = vmatpush1.msra.mxu0 %v1172
    %1618 = vmatprep.subr.mxu0 %v1175
    %1619 = vmatpush1.msra.mxu0 %v1174
    %1620 = vmatprep.subr.mxu0 %v1177
    %1621 = vmatpush1.msra.mxu0 %v1176
    %1622 = vmatprep.subr.mxu0 %v1179
    %1623 = vmatpush1.msra.mxu0 %v1178
    %1624 = vmatprep.subr.mxu0 %v1181
    %1625 = vmatpush1.msra.mxu0 %v1180
    %1626 = vmatprep.subr.mxu0 %v1183
    %1627 = vmatpush1.msra.mxu0 %v1182
    %1628 = vmatprep.subr.mxu0 0.0
    %1629 = vmatpush1.msra.mxu0 0.0
    %1630 = vmatprep.subr.mxu0 0.0
    %1631 = vmatpush1.msra.mxu0 0.0
    %1632 = vmatprep.subr.mxu0 0.0
    %1633 = vmatpush1.msra.mxu0 0.0
    %1634 = vmatprep.subr.mxu0 0.0
    %1635 = vmatpush1.msra.mxu0 0.0
    %1636 = vmatprep.subr.mxu0 0.0
    %1637 = vmatpush1.msra.mxu0 0.0
    %1638 = vmatprep.subr.mxu0 0.0
    %1639 = vmatpush1.msra.mxu0 0.0
    %1640 = vmatprep.subr.mxu0 0.0
    %1641 = vmatpush1.msra.mxu0 0.0
    %1642 = vmatprep.subr.mxu0 0.0
    %1643 = vmatpush1.msra.mxu0 0.0
    %1644 = vmatprep.subr.mxu0 0.0
    %1645 = vmatpush1.msra.mxu0 0.0
    %1646 = vmatprep.subr.mxu0 0.0
    %1647 = vmatpush1.msra.mxu0 0.0
    %1648 = vmatprep.subr.mxu0 0.0
    %1649 = vmatpush1.msra.mxu0 0.0
    %1650 = vmatprep.subr.mxu0 0.0
    %1651 = vmatpush1.msra.mxu0 0.0
    %1652 = vmatprep.subr.mxu0 0.0
    %1653 = vmatpush1.msra.mxu0 0.0
    %1654 = vmatprep.subr.mxu0 0.0
    %1655 = vmatpush1.msra.mxu0 0.0
    %1656 = vmatprep.subr.mxu0 0.0
    %1657 = vmatpush1.msra.mxu0 0.0
    %1658 = vmatprep.subr.mxu0 0.0
    %1659 = vmatpush1.msra.mxu0 0.0
    %1660 = vmatprep.subr.mxu0 0.0
    %1661 = vmatpush1.msra.mxu0 0.0
    %1662 = vmatprep.subr.mxu0 0.0
    %1663 = vmatpush1.msra.mxu0 0.0
    %1664 = vmatprep.subr.mxu0 0.0
    %1665 = vmatpush1.msra.mxu0 0.0
    %1666 = vmatprep.subr.mxu0 0.0
    %1667 = vmatpush1.msra.mxu0 0.0
    %1668 = vmatprep.subr.mxu0 0.0
    %1669 = vmatpush1.msra.mxu0 0.0
    %1670 = vmatprep.subr.mxu0 0.0
    %1671 = vmatpush1.msra.mxu0 0.0
    %1672 = vmatprep.subr.mxu0 0.0
    %1673 = vmatpush1.msra.mxu0 0.0
    %1674 = vmatprep.subr.mxu0 0.0
    %1675 = vmatpush1.msra.mxu0 0.0
    %1676 = vmatprep.mubr.f32.mxu0 0.0
    %1677 = vmatmul.mubr.f32.gmra.mrb[0].mxu0 %v1610
    %v1678 = vpop.f32.mrb[0].mxu0
    %v1679 = vadd.f32 0.0, %v1678
    %v1680 = vpop.f32.mrb[0].mxu0
    %v1681 = vadd.f32 0.0, %v1680
    %1682 = vdwg.mxu0
    %v1683 = vadd.f32 %v1164, %v1679
    %v1684 = vxor.u32 %v1683, 2147483648
    %v1685 = vmul.f32 %v1684, 1.442695
    %v1686 = vpow.pop %v1685
    %v1687 = vadd.f32 %v1686, 1.0
    %v1688 = vrcp.pop %v1687
    %v1689 = vmul.f32 1.0, %v1688
    %v1690 = vadd.f32 %v1681, %v1267
    %v1691 = vmul.f32 %v1689, %v1690
    %v1692 = vadd.f32 %v1166, %v1691
    %v1693 = vtanh.pop %v1692
    %v1695 = vrot.slane %v1693, 2
    %v1697 = vsub.f32 %v1606, %v1695
    %v1699 = vrot.slane %v1697, 6
    %1700 = vrot.lane.b32.xlu0 %v1699, 64
    %v1701 = vpop.permute.xlu0 %1700
    %v1703 = vmul.f32 %v1689, %v1701
    %1705 = vrot.lane.b32.xlu0 %v1703, 64
    %v1706 = vpop.permute.xlu0 %1705
    %v1708 = vadd.f32 %v1693, %v1706
    %1709 = vst.msk [vmem:[%s9 + $0x8] sm:$0x3] %vm302, %v1708
    %v1711 = vsel %vm199, %v1708, 0
    %1713 = vmatprep.subr.mxu0 %v1169
    %1714 = vmatpush1.msra.mxu0 %v1168
    %1715 = vmatprep.subr.mxu0 %v1171
    %1716 = vmatpush1.msra.mxu0 %v1170
    %1717 = vmatprep.subr.mxu0 %v1173
    %1718 = vmatpush1.msra.mxu0 %v1172
    %1719 = vmatprep.subr.mxu0 %v1175
    %1720 = vmatpush1.msra.mxu0 %v1174
    %1721 = vmatprep.subr.mxu0 %v1177
    %1722 = vmatpush1.msra.mxu0 %v1176
    %1723 = vmatprep.subr.mxu0 %v1179
    %1724 = vmatpush1.msra.mxu0 %v1178
    %1725 = vmatprep.subr.mxu0 %v1181
    %1726 = vmatpush1.msra.mxu0 %v1180
    %1727 = vmatprep.subr.mxu0 %v1183
    %1728 = vmatpush1.msra.mxu0 %v1182
    %1729 = vmatprep.subr.mxu0 0.0
    %1730 = vmatpush1.msra.mxu0 0.0
    %1731 = vmatprep.subr.mxu0 0.0
    %1732 = vmatpush1.msra.mxu0 0.0
    %1733 = vmatprep.subr.mxu0 0.0
    %1734 = vmatpush1.msra.mxu0 0.0
    %1735 = vmatprep.subr.mxu0 0.0
    %1736 = vmatpush1.msra.mxu0 0.0
    %1737 = vmatprep.subr.mxu0 0.0
    %1738 = vmatpush1.msra.mxu0 0.0
    %1739 = vmatprep.subr.mxu0 0.0
    %1740 = vmatpush1.msra.mxu0 0.0
    %1741 = vmatprep.subr.mxu0 0.0
    %1742 = vmatpush1.msra.mxu0 0.0
    %1743 = vmatprep.subr.mxu0 0.0
    %1744 = vmatpush1.msra.mxu0 0.0
    %1745 = vmatprep.subr.mxu0 0.0
    %1746 = vmatpush1.msra.mxu0 0.0
    %1747 = vmatprep.subr.mxu0 0.0
    %1748 = vmatpush1.msra.mxu0 0.0
    %1749 = vmatprep.subr.mxu0 0.0
    %1750 = vmatpush1.msra.mxu0 0.0
    %1751 = vmatprep.subr.mxu0 0.0
    %1752 = vmatpush1.msra.mxu0 0.0
    %1753 = vmatprep.subr.mxu0 0.0
    %1754 = vmatpush1.msra.mxu0 0.0
    %1755 = vmatprep.subr.mxu0 0.0
    %1756 = vmatpush1.msra.mxu0 0.0
    %1757 = vmatprep.subr.mxu0 0.0
    %1758 = vmatpush1.msra.mxu0 0.0
    %1759 = vmatprep.subr.mxu0 0.0
    %1760 = vmatpush1.msra.mxu0 0.0
    %1761 = vmatprep.subr.mxu0 0.0
    %1762 = vmatpush1.msra.mxu0 0.0
    %1763 = vmatprep.subr.mxu0 0.0
    %1764 = vmatpush1.msra.mxu0 0.0
    %1765 = vmatprep.subr.mxu0 0.0
    %1766 = vmatpush1.msra.mxu0 0.0
    %1767 = vmatprep.subr.mxu0 0.0
    %1768 = vmatpush1.msra.mxu0 0.0
    %1769 = vmatprep.subr.mxu0 0.0
    %1770 = vmatpush1.msra.mxu0 0.0
    %1771 = vmatprep.subr.mxu0 0.0
    %1772 = vmatpush1.msra.mxu0 0.0
    %1773 = vmatprep.subr.mxu0 0.0
    %1774 = vmatpush1.msra.mxu0 0.0
    %1775 = vmatprep.subr.mxu0 0.0
    %1776 = vmatpush1.msra.mxu0 0.0
    %1777 = vmatprep.mubr.f32.mxu0 0.0
    %1778 = vmatmul.mubr.f32.gmra.mrb[0].mxu0 %v1711
    %v1779 = vpop.f32.mrb[0].mxu0
    %v1780 = vadd.f32 0.0, %v1779
    %v1781 = vpop.f32.mrb[0].mxu0
    %v1782 = vadd.f32 0.0, %v1781
    %1783 = vdwg.mxu0
    %v1785 = vrot.slane %v1780, 6
    %v1787 = vadd.f32 %v1164, %v1785
    %v1788 = vxor.u32 %v1787, 2147483648
    %v1789 = vmul.f32 %v1788, 1.442695
    %v1790 = vpow.pop %v1789
    %v1791 = vadd.f32 %v1790, 1.0
    %v1792 = vrcp.pop %v1791
    %v1793 = vmul.f32 1.0, %v1792
    %v1794 = vadd.f32 %v1782, %v1267
    %v1796 = vrot.slane %v1794, 6
    %v1798 = vmul.f32 %v1793, %v1796
    %v1799 = vadd.f32 %v1166, %v1798
    %v1800 = vtanh.pop %v1799
    %v1802 = vrot.slane %v1800, 2
    %v1804 = vsub.f32 %v1708, %v1802
    %v1806 = vrot.slane %v1804, 6
    %1807 = vrot.lane.b32.xlu0 %v1806, 64
    %v1808 = vpop.permute.xlu0 %1807
    %v1810 = vmul.f32 %v1793, %v1808
    %1812 = vrot.lane.b32.xlu0 %v1810, 64
    %v1813 = vpop.permute.xlu0 %1812
    %v1815 = vadd.f32 %v1800, %v1813
    %1816 = vst.msk [vmem:[%s9 + $0x8] sm:$0xc] %vm410, %v1815
    %v1818 = vrot.slane %v1815, 2
    %v1819 = vsel %vm199, %v1818, 0
    %1821 = vmatprep.subr.mxu0 %v1169
    %1822 = vmatpush1.msra.mxu0 %v1168
    %1823 = vmatprep.subr.mxu0 %v1171
    %1824 = vmatpush1.msra.mxu0 %v1170
    %1825 = vmatprep.subr.mxu0 %v1173
    %1826 = vmatpush1.msra.mxu0 %v1172
    %1827 = vmatprep.subr.mxu0 %v1175
    %1828 = vmatpush1.msra.mxu0 %v1174
    %1829 = vmatprep.subr.mxu0 %v1177
    %1830 = vmatpush1.msra.mxu0 %v1176
    %1831 = vmatprep.subr.mxu0 %v1179
    %1832 = vmatpush1.msra.mxu0 %v1178
    %1833 = vmatprep.subr.mxu0 %v1181
    %1834 = vmatpush1.msra.mxu0 %v1180
    %1835 = vmatprep.subr.mxu0 %v1183
    %1836 = vmatpush1.msra.mxu0 %v1182
    %1837 = vmatprep.subr.mxu0 0.0
    %1838 = vmatpush1.msra.mxu0 0.0
    %1839 = vmatprep.subr.mxu0 0.0
    %1840 = vmatpush1.msra.mxu0 0.0
    %1841 = vmatprep.subr.mxu0 0.0
    %1842 = vmatpush1.msra.mxu0 0.0
    %1843 = vmatprep.subr.mxu0 0.0
    %1844 = vmatpush1.msra.mxu0 0.0
    %1845 = vmatprep.subr.mxu0 0.0
    %1846 = vmatpush1.msra.mxu0 0.0
    %1847 = vmatprep.subr.mxu0 0.0
    %1848 = vmatpush1.msra.mxu0 0.0
    %1849 = vmatprep.subr.mxu0 0.0
    %1850 = vmatpush1.msra.mxu0 0.0
    %1851 = vmatprep.subr.mxu0 0.0
    %1852 = vmatpush1.msra.mxu0 0.0
    %1853 = vmatprep.subr.mxu0 0.0
    %1854 = vmatpush1.msra.mxu0 0.0
    %1855 = vmatprep.subr.mxu0 0.0
    %1856 = vmatpush1.msra.mxu0 0.0
    %1857 = vmatprep.subr.mxu0 0.0
    %1858 = vmatpush1.msra.mxu0 0.0
    %1859 = vmatprep.subr.mxu0 0.0
    %1860 = vmatpush1.msra.mxu0 0.0
    %1861 = vmatprep.subr.mxu0 0.0
    %1862 = vmatpush1.msra.mxu0 0.0
    %1863 = vmatprep.subr.mxu0 0.0
    %1864 = vmatpush1.msra.mxu0 0.0
    %1865 = vmatprep.subr.mxu0 0.0
    %1866 = vmatpush1.msra.mxu0 0.0
    %1867 = vmatprep.subr.mxu0 0.0
    %1868 = vmatpush1.msra.mxu0 0.0
    %1869 = vmatprep.subr.mxu0 0.0
    %1870 = vmatpush1.msra.mxu0 0.0
    %1871 = vmatprep.subr.mxu0 0.0
    %1872 = vmatpush1.msra.mxu0 0.0
    %1873 = vmatprep.subr.mxu0 0.0
    %1874 = vmatpush1.msra.mxu0 0.0
    %1875 = vmatprep.subr.mxu0 0.0
    %1876 = vmatpush1.msra.mxu0 0.0
    %1877 = vmatprep.subr.mxu0 0.0
    %1878 = vmatpush1.msra.mxu0 0.0
    %1879 = vmatprep.subr.mxu0 0.0
    %1880 = vmatpush1.msra.mxu0 0.0
    %1881 = vmatprep.subr.mxu0 0.0
    %1882 = vmatpush1.msra.mxu0 0.0
    %1883 = vmatprep.subr.mxu0 0.0
    %1884 = vmatpush1.msra.mxu0 0.0
    %1885 = vmatprep.mubr.f32.mxu0 0.0
    %1886 = vmatmul.mubr.f32.gmra.mrb[0].mxu0 %v1819
    %v1887 = vpop.f32.mrb[0].mxu0
    %v1888 = vadd.f32 0.0, %v1887
    %v1889 = vpop.f32.mrb[0].mxu0
    %v1890 = vadd.f32 0.0, %v1889
    %1891 = vdwg.mxu0
    %v1893 = vrot.slane %v1888, 4
    %v1895 = vadd.f32 %v1164, %v1893
    %v1896 = vxor.u32 %v1895, 2147483648
    %v1897 = vmul.f32 %v1896, 1.442695
    %v1898 = vpow.pop %v1897
    %v1899 = vadd.f32 %v1898, 1.0
    %v1900 = vrcp.pop %v1899
    %v1901 = vmul.f32 1.0, %v1900
    %v1902 = vadd.f32 %v1890, %v1267
    %v1904 = vrot.slane %v1902, 4
    %v1906 = vmul.f32 %v1901, %v1904
    %v1907 = vadd.f32 %v1166, %v1906
    %v1908 = vtanh.pop %v1907
    %v1910 = vrot.slane %v1908, 2
    %v1912 = vsub.f32 %v1815, %v1910
    %v1914 = vrot.slane %v1912, 6
    %1915 = vrot.lane.b32.xlu0 %v1914, 64
    %v1916 = vpop.permute.xlu0 %1915
    %v1918 = vmul.f32 %v1901, %v1916
    %1920 = vrot.lane.b32.xlu0 %v1918, 64
    %v1921 = vpop.permute.xlu0 %1920
    %v1923 = vadd.f32 %v1908, %v1921
    %1924 = vst.msk [vmem:[%s9 + $0x8] sm:$0x30] %vm519, %v1923
    %v1926 = vrot.slane %v1923, 4
    %v1927 = vsel %vm199, %v1926, 0
    %1929 = vmatprep.subr.mxu0 %v1169
    %1930 = vmatpush1.msra.mxu0 %v1168
    %1931 = vmatprep.subr.mxu0 %v1171
    %1932 = vmatpush1.msra.mxu0 %v1170
    %1933 = vmatprep.subr.mxu0 %v1173
    %1934 = vmatpush1.msra.mxu0 %v1172
    %1935 = vmatprep.subr.mxu0 %v1175
    %1936 = vmatpush1.msra.mxu0 %v1174
    %1937 = vmatprep.subr.mxu0 %v1177
    %1938 = vmatpush1.msra.mxu0 %v1176
    %1939 = vmatprep.subr.mxu0 %v1179
    %1940 = vmatpush1.msra.mxu0 %v1178
    %1941 = vmatprep.subr.mxu0 %v1181
    %1942 = vmatpush1.msra.mxu0 %v1180
    %1943 = vmatprep.subr.mxu0 %v1183
    %1944 = vmatpush1.msra.mxu0 %v1182
    %1945 = vmatprep.subr.mxu0 0.0
    %1946 = vmatpush1.msra.mxu0 0.0
    %1947 = vmatprep.subr.mxu0 0.0
    %1948 = vmatpush1.msra.mxu0 0.0
    %1949 = vmatprep.subr.mxu0 0.0
    %1950 = vmatpush1.msra.mxu0 0.0
    %1951 = vmatprep.subr.mxu0 0.0
    %1952 = vmatpush1.msra.mxu0 0.0
    %1953 = vmatprep.subr.mxu0 0.0
    %1954 = vmatpush1.msra.mxu0 0.0
    %1955 = vmatprep.subr.mxu0 0.0
    %1956 = vmatpush1.msra.mxu0 0.0
    %1957 = vmatprep.subr.mxu0 0.0
    %1958 = vmatpush1.msra.mxu0 0.0
    %1959 = vmatprep.subr.mxu0 0.0
    %1960 = vmatpush1.msra.mxu0 0.0
    %1961 = vmatprep.subr.mxu0 0.0
    %1962 = vmatpush1.msra.mxu0 0.0
    %1963 = vmatprep.subr.mxu0 0.0
    %1964 = vmatpush1.msra.mxu0 0.0
    %1965 = vmatprep.subr.mxu0 0.0
    %1966 = vmatpush1.msra.mxu0 0.0
    %1967 = vmatprep.subr.mxu0 0.0
    %1968 = vmatpush1.msra.mxu0 0.0
    %1969 = vmatprep.subr.mxu0 0.0
    %1970 = vmatpush1.msra.mxu0 0.0
    %1971 = vmatprep.subr.mxu0 0.0
    %1972 = vmatpush1.msra.mxu0 0.0
    %1973 = vmatprep.subr.mxu0 0.0
    %1974 = vmatpush1.msra.mxu0 0.0
    %1975 = vmatprep.subr.mxu0 0.0
    %1976 = vmatpush1.msra.mxu0 0.0
    %1977 = vmatprep.subr.mxu0 0.0
    %1978 = vmatpush1.msra.mxu0 0.0
    %1979 = vmatprep.subr.mxu0 0.0
    %1980 = vmatpush1.msra.mxu0 0.0
    %1981 = vmatprep.subr.mxu0 0.0
    %1982 = vmatpush1.msra.mxu0 0.0
    %1983 = vmatprep.subr.mxu0 0.0
    %1984 = vmatpush1.msra.mxu0 0.0
    %1985 = vmatprep.subr.mxu0 0.0
    %1986 = vmatpush1.msra.mxu0 0.0
    %1987 = vmatprep.subr.mxu0 0.0
    %1988 = vmatpush1.msra.mxu0 0.0
    %1989 = vmatprep.subr.mxu0 0.0
    %1990 = vmatpush1.msra.mxu0 0.0
    %1991 = vmatprep.subr.mxu0 0.0
    %1992 = vmatpush1.msra.mxu0 0.0
    %1993 = vmatprep.mubr.f32.mxu0 0.0
    %1994 = vmatmul.mubr.f32.gmra.mrb[0].mxu0 %v1927
    %v1995 = vpop.f32.mrb[0].mxu0
    %v1996 = vadd.f32 0.0, %v1995
    %v1997 = vpop.f32.mrb[0].mxu0
    %v1998 = vadd.f32 0.0, %v1997
    %1999 = vdwg.mxu0
    %v2001 = vrot.slane %v1996, 2
    %v2003 = vadd.f32 %v1164, %v2001
    %v2004 = vxor.u32 %v2003, 2147483648
    %v2005 = vmul.f32 %v2004, 1.442695
    %v2006 = vpow.pop %v2005
    %v2007 = vadd.f32 %v2006, 1.0
    %v2008 = vrcp.pop %v2007
    %v2009 = vmul.f32 1.0, %v2008
    %v2010 = vadd.f32 %v1998, %v1267
    %v2012 = vrot.slane %v2010, 2
    %v2014 = vmul.f32 %v2009, %v2012
    %v2015 = vadd.f32 %v1166, %v2014
    %v2016 = vtanh.pop %v2015
    %v2018 = vrot.slane %v2016, 2
    %v2020 = vsub.f32 %v1923, %v2018
    %v2022 = vrot.slane %v2020, 6
    %2023 = vrot.lane.b32.xlu0 %v2022, 64
    %v2024 = vpop.permute.xlu0 %2023
    %v2026 = vmul.f32 %v2009, %v2024
    %2028 = vrot.lane.b32.xlu0 %v2026, 64
    %v2029 = vpop.permute.xlu0 %2028
    %v2031 = vadd.f32 %v2016, %v2029
    %2032 = vst.msk [vmem:[%s9 + $0x8] sm:$0xc0] %vm628, %v2031
    // Predicated region
    $region50: #{climate_gru_forward.1} parent=1 // pred_check
      _
    $region51: #{climate_gru_forward.1} parent=1 // pred_check_branch
      %2034 = sbr.rel (0) target = $region53
    $region52: #{climate_gru_forward.1} parent=1 // pred_region
      _
    $region53: #{climate_gru_forward.1} parent=1 // pred_fallthru
      _
    // Predicated region
    $region54: #{climate_gru_forward.1} parent=1 // pred_check
      _
    $region55: #{climate_gru_forward.1} parent=1 // pred_check_branch
      %2036 = sbr.rel (0) target = $region57
    $region56: #{climate_gru_forward.1} parent=1 // pred_region
      _
    $region57: #{climate_gru_forward.1} parent=1 // pred_fallthru
      _
    %2037 = vsyncpa [#allocation4], 1
    %2038 = vsyncpa [#allocation6], 1

</llo_original>
